<compile_context>
chip_gen: v5e
topology: v5e:2x2
jax: 0.10.0
libtpu: 0.0.40
codegen_flags: <defaults>
</compile_context>

<pallas_src>
import functools

import jax
import jax.numpy as jnp
from jax.experimental import pallas as pl
from jax.experimental.pallas import tpu as pltpu

L = 512   # feature hidden dim
D = 128   # attention hidden dim
K = 1     # attention heads


def _round_up(x, m):
    return (x + m - 1) // m * m


def _elementwise_bf16_default():
    """bf16 VPU/EUP exists on v6e/v7x; keep f32 elementwise on v5 and older."""
    try:
        kind = jax.devices()[0].device_kind.lower()
    except Exception:
        return True
    return not any(tag in kind for tag in ("v2", "v3", "v4", "v5"))


def expert_kernel(x_ref, w1_ref, b1_ref, wa_ref, ba_ref, wk_ref, out_ref,
                  *scratch, n_valid, tile_n, need_mask, single_tile, ew_dtype):
    # ---- feature = GELU(x @ W1 + b1) ------------------------ MXU (bf16 -> f32)
    x_bf = x_ref[...].astype(jnp.bfloat16)           # in-kernel cast (no HBM pass)
    feat = jnp.dot(x_bf, w1_ref[...], preferred_element_type=jnp.float32)
    feat = jax.nn.gelu(feat.astype(ew_dtype) + b1_ref[...], approximate=True)
    # TODO(synk): Dropout(0.25) omitted (inference / eval semantics); tanh-GELU
    # deviates from nn.GELU() exact erf by ~1e-3 max abs.
    feat_mm = feat if ew_dtype == jnp.bfloat16 else feat.astype(jnp.bfloat16)

    # ---- attention hidden: tanh(feat @ Wa + ba) -------------- MXU (bf16 -> f32)
    h = jnp.dot(feat_mm, wa_ref[...], preferred_element_type=jnp.float32)
    h = jnp.tanh(h.astype(ew_dtype) + ba_ref[...])                 # (tile_n, D)
    h_mm = h if ew_dtype == jnp.bfloat16 else h.astype(jnp.bfloat16)

    # ---- attention logits as a lane-dense row: wk_row @ h^T --------------- MXU
    # (bk dropped: a constant added to every logit cancels in softmax.)
    logits = jax.lax.dot_general(
        wk_ref[...], h_mm, (((1,), (1,)), ((), ())),
        preferred_element_type=jnp.float32)                        # (1, tile_n)

    if need_mask:  # static flag: only emitted when N was padded up to tile_n
        if single_tile:
            rem = n_valid
        else:
            rem = n_valid - pl.program_id(1) * tile_n              # scalar math
        col = jax.lax.broadcasted_iota(jnp.int32, (1, tile_n), 1)
        logits = jnp.where(col < rem, logits, jnp.float32(-1e30))

    if single_tile:
        # ---- plain in-tile softmax (no online-softmax bookkeeping) -----------
        m = jnp.max(logits, axis=-1, keepdims=True)
        p = jnp.exp(logits - m)                                    # (1, tile_n)
        l = jnp.sum(p, axis=-1, keepdims=True)
        part = jnp.dot(p.astype(jnp.bfloat16), feat_mm,
                       preferred_element_type=jnp.float32)         # (1, L)
        out_ref[...] = (part / l).astype(out_ref.dtype)
    else:
        m_sc, l_sc, acc_sc = scratch
        t = pl.program_id(1)

        @pl.when(t == 0)
        def _init():
            m_sc[...] = jnp.full(m_sc.shape, -jnp.inf, dtype=m_sc.dtype)
            l_sc[...] = jnp.zeros(l_sc.shape, dtype=l_sc.dtype)
            acc_sc[...] = jnp.zeros(acc_sc.shape, dtype=acc_sc.dtype)

        # ---- online softmax update (exact: rescale by exp(m_old - m_new)) ----
        m_old = m_sc[...]                                          # (1, 1)
        m_new = jnp.maximum(m_old, jnp.max(logits, axis=-1, keepdims=True))
        alpha = jnp.exp(m_old - m_new)                             # (1, 1)
        p = jnp.exp(logits - m_new)                                # (1, tile_n)
        l_sc[...] = alpha * l_sc[...] + jnp.sum(p, axis=-1, keepdims=True)
        # Weighted partial sum on the MXU: (1, tile_n) @ (tile_n, L), bf16 in.
        part = jnp.dot(p.astype(jnp.bfloat16), feat_mm,
                       preferred_element_type=jnp.float32)         # (1, L)
        acc_sc[...] = alpha * acc_sc[...] + part
        m_sc[...] = m_new

        @pl.when(t == pl.num_programs(1) - 1)
        def _finalize():
            # Exact division: finalize runs once per bag, approx buys nothing.
            out_ref[...] = (acc_sc[...] / l_sc[...]).astype(out_ref.dtype)


def expert_forward(x, w1, b1, wa, ba, wk, bk=None, *, tile_n=1024):
    """x: (N, in_dim) or (B, N, in_dim) float32. Returns (K, L) or (B, K, L).

    bk is accepted for interface parity with the PyTorch module but is unused:
    a constant logit offset cancels exactly in softmax.
    """
    del bk
    squeeze = x.ndim == 2
    if squeeze:
        x = x[None]
    b, n, in_dim = x.shape

    # 16-aligned tiles (bf16 sublane pack); pad N up to a tile multiple.
    tile_n = _round_up(min(tile_n, _round_up(n, 16)), 16)
    n_pad = _round_up(n, tile_n)
    if n_pad != n:
        # Keep zero padding (masked logits alone would still let NaN-free rows
        # matter through 0*NaN in the weighted sum if rows were garbage).
        x = jnp.pad(x, ((0, 0), (0, n_pad - n), (0, 0)))
    num_tiles = n_pad // tile_n
    single_tile = num_tiles == 1

    ew_dtype = jnp.bfloat16 if _elementwise_bf16_default() else jnp.float32

    # x streams as f32 (cast to bf16 in-kernel); big MXU weights in bf16; biases
    # in the elementwise dtype; wk as a lane-dense bf16 row.
    w1_bf = w1.astype(jnp.bfloat16)
    wa_bf = wa.astype(jnp.bfloat16)
    b1_c = b1.astype(ew_dtype).reshape(1, L)
    ba_c = ba.astype(ew_dtype).reshape(1, D)
    wk_row = wk.astype(jnp.bfloat16).reshape(1, D)   # (D, K) -> (1, D) row

    kernel = functools.partial(expert_kernel, n_valid=n, tile_n=tile_n,
                               need_mask=(n_pad != n), single_tile=single_tile,
                               ew_dtype=ew_dtype)

    flops = 2 * b * n_pad * (in_dim * L + L * D + D + L)
    transcendentals = b * n_pad * (L + D + 1)
    bytes_accessed = (x.size * 4 + w1_bf.size * 2 + wa_bf.size * 2
                      + b1_c.size * b1_c.dtype.itemsize
                      + ba_c.size * ba_c.dtype.itemsize
                      + wk_row.size * 2 + b * K * L * 4)

    scratch_shapes = [] if single_tile else [
        pltpu.VMEM((1, 1), jnp.float32),   # running max
        pltpu.VMEM((1, 1), jnp.float32),   # running softmax denominator
        pltpu.VMEM((K, L), jnp.float32),   # unnormalized accumulator
    ]

    out = pl.pallas_call(
        kernel,
        out_shape=jax.ShapeDtypeStruct((b, K, L), jnp.float32),
        grid_spec=pltpu.PrefetchScalarGridSpec(
            num_scalar_prefetch=0,
            grid=(b, num_tiles),
            in_specs=[
                # streamed instance tiles (double-buffered by the pipeline)
                pl.BlockSpec((None, tile_n, in_dim), lambda bi, ti: (bi, ti, 0)),
                # weights / biases: constant index maps -> DMA'd once, VMEM-resident
                pl.BlockSpec((in_dim, L), lambda bi, ti: (0, 0)),
                pl.BlockSpec((1, L), lambda bi, ti: (0, 0)),
                pl.BlockSpec((L, D), lambda bi, ti: (0, 0)),
                pl.BlockSpec((1, D), lambda bi, ti: (0, 0)),
                pl.BlockSpec((1, D), lambda bi, ti: (0, 0)),
            ],
            out_specs=pl.BlockSpec((None, K, L), lambda bi, ti: (bi, 0, 0)),
            scratch_shapes=scratch_shapes,
        ),
        compiler_params=pltpu.CompilerParams(
            dimension_semantics=("parallel", "arbitrary"),
            # Plenty for these shapes; raise for very large in_dim * tile_n.
            vmem_limit_bytes=32 * 1024 * 1024,
        ),
        cost_estimate=pl.CostEstimate(flops=flops,
                                      transcendentals=transcendentals,
                                      bytes_accessed=bytes_accessed),
    )(x, w1_bf, b1_c, wa_bf, ba_c, wk_row)
    return out[0] if squeeze else out


def init_params(key, in_dim):
    """Deterministic synthetic parameters (same shapes as the PyTorch module)."""
    k1, k2, k3, k4, k5, k6 = jax.random.split(key, 6)
    scale = lambda fan_in: 1.0 / jnp.sqrt(jnp.float32(fan_in))
    # Stored pre-transposed: (in, out).
    w1 = jax.random.uniform(k1, (in_dim, L), jnp.float32, -1, 1) * scale(in_dim)
    b1 = jax.random.uniform(k2, (1, L), jnp.float32, -1, 1) * scale(in_dim)
    wa = jax.random.uniform(k3, (L, D), jnp.float32, -1, 1) * scale(L)
    ba = jax.random.uniform(k4, (1, D), jnp.float32, -1, 1) * scale(L)
    wk = jax.random.uniform(k5, (D, K), jnp.float32, -1, 1) * scale(D)
    bk = jax.random.uniform(k6, (1, K), jnp.float32, -1, 1) * scale(D)
    return w1, b1, wa, ba, wk, bk


def reference_forward(x, w1, b1, wa, ba, wk, bk):
    feat = jax.nn.gelu(x @ w1 + b1, approximate=False)   # exact GELU (nn.GELU())
    a = jnp.tanh(feat @ wa + ba) @ wk + bk                # (N, 1)
    a = jax.nn.softmax(a.T, axis=-1)                      # (1, N)
    return a @ feat                                       # (1, L)


if __name__ == "__main__":
    key = jax.random.PRNGKey(0)
    kx, kp = jax.random.split(key)

    B, N, in_dim = 2, 320, 32                              # 2 bags of 320 instances
    x = jax.random.normal(kx, (B, N, in_dim), jnp.float32)
    params = init_params(kp, in_dim)

    m_ref = jax.vmap(lambda xb: reference_forward(xb, *params))(x)

    # Multi-tile path: tile_n=128 -> 3 N-tiles per bag (last one padded/masked);
    # exercises the streaming online-softmax reduction and the parallel bag axis.
    m = jax.block_until_ready(expert_forward(x, *params, tile_n=128))
    assert m.shape == (B, K, L)
    max_err = jnp.max(jnp.abs(m - m_ref))
    assert jnp.allclose(m, m_ref, atol=3e-2, rtol=3e-2), (
        f"multi-tile mismatch vs reference: max|diff|={max_err:.3e}")

    # Single-tile specialized path (default tile_n >= N) with 2-D input,
    # matching the PyTorch module's forward(x).
    m1 = jax.block_until_ready(expert_forward(x[0], *params))
    assert m1.shape == (K, L)
    max_err1 = jnp.max(jnp.abs(m1 - m_ref[0]))
    assert jnp.allclose(m1, m_ref[0], atol=3e-2, rtol=3e-2), (
        f"single-tile mismatch vs reference: max|diff|={max_err1:.3e}")

    print("KERNEL_OK")
</pallas_src>

<mosaic_0001>
module attributes {stable_mosaic.version = 11 : i64} {
  func.func @expert_kernel(%arg0: i32, %arg1: i32, %arg2: memref<1x128x32xf32, #tpu.memory_space<vmem>>, %arg3: memref<32x512xbf16, #tpu.memory_space<vmem>>, %arg4: memref<1x512xbf16, #tpu.memory_space<vmem>>, %arg5: memref<512x128xbf16, #tpu.memory_space<vmem>>, %arg6: memref<1x128xbf16, #tpu.memory_space<vmem>>, %arg7: memref<1x128xbf16, #tpu.memory_space<vmem>>, %arg8: memref<1x1x512xf32, #tpu.memory_space<vmem>>, %arg9: memref<1x1xf32, #tpu.memory_space<vmem>>, %arg10: memref<1x1xf32, #tpu.memory_space<vmem>>, %arg11: memref<1x512xf32, #tpu.memory_space<vmem>>) attributes {dimension_semantics = [#tpu.dimension_semantics<parallel>, #tpu.dimension_semantics<arbitrary>], iteration_bounds = array<i64: 2, 3>, scalar_prefetch = 0 : i64, scratch_operands = 3 : i64, tpu.core_type = #tpu.core_type<tc>, window_params = [{transform_indices = @transform_0, window_bounds = array<i64: 1, 128, 32>}, {pipeline_mode = #tpu.pipeline_mode<synchronous>, transform_indices = @transform_1, window_bounds = array<i64: 32, 512>}, {pipeline_mode = #tpu.pipeline_mode<synchronous>, transform_indices = @transform_2, window_bounds = array<i64: 1, 512>}, {pipeline_mode = #tpu.pipeline_mode<synchronous>, transform_indices = @transform_3, window_bounds = array<i64: 512, 128>}, {pipeline_mode = #tpu.pipeline_mode<synchronous>, transform_indices = @transform_4, window_bounds = array<i64: 1, 128>}, {pipeline_mode = #tpu.pipeline_mode<synchronous>, transform_indices = @transform_5, window_bounds = array<i64: 1, 128>}, {transform_indices = @transform_6, window_bounds = array<i64: 1, 1, 512>}]} {
    %c0 = arith.constant 0 : index
    %c0_0 = arith.constant 0 : index
    %c0_1 = arith.constant 0 : index
    %0 = vector.load %arg2[%c0, %c0_0, %c0_1] : memref<1x128x32xf32, #tpu.memory_space<vmem>>, vector<1x128x32xf32>
    %1 = vector.shape_cast %0 : vector<1x128x32xf32> to vector<128x32xf32>
    %2 = arith.truncf %1 : vector<128x32xf32> to vector<128x32xbf16>
    %c0_2 = arith.constant 0 : index
    %c0_3 = arith.constant 0 : index
    %3 = vector.load %arg3[%c0_2, %c0_3] : memref<32x512xbf16, #tpu.memory_space<vmem>>, vector<32x512xbf16>
    %cst = arith.constant dense<0.000000e+00> : vector<128x512xf32>
    %4 = tpu.matmul %2, %3, %cst {dimension_numbers = #tpu.dot_dimension_numbers<[1], [0], [0], [1], [0, 0, 1, 1], [], []>} : vector<128x32xbf16>, vector<32x512xbf16>, vector<128x512xf32> -> vector<128x512xf32>
    %5 = arith.truncf %4 : vector<128x512xf32> to vector<128x512xbf16>
    %c0_4 = arith.constant 0 : index
    %c0_5 = arith.constant 0 : index
    %6 = vector.load %arg4[%c0_4, %c0_5] : memref<1x512xbf16, #tpu.memory_space<vmem>>, vector<1x512xbf16>
    %7 = vector.broadcast %6 : vector<1x512xbf16> to vector<128x512xbf16>
    %8 = arith.addf %5, %7 : vector<128x512xbf16>
    %9 = arith.mulf %8, %8 : vector<128x512xbf16>
    %10 = arith.mulf %8, %9 : vector<128x512xbf16>
    %cst_6 = arith.constant 4.467770e-02 : bf16
    %11 = vector.broadcast %cst_6 : bf16 to vector<128x512xbf16>
    %12 = arith.mulf %11, %10 : vector<128x512xbf16>
    %13 = arith.addf %8, %12 : vector<128x512xbf16>
    %cst_7 = arith.constant 7.968750e-01 : bf16
    %14 = vector.broadcast %cst_7 : bf16 to vector<128x512xbf16>
    %15 = arith.mulf %14, %13 : vector<128x512xbf16>
    %16 = math.tanh %15 : vector<128x512xbf16>
    %cst_8 = arith.constant 1.000000e+00 : bf16
    %17 = vector.broadcast %cst_8 : bf16 to vector<128x512xbf16>
    %18 = arith.addf %17, %16 : vector<128x512xbf16>
    %cst_9 = arith.constant 5.000000e-01 : bf16
    %19 = vector.broadcast %cst_9 : bf16 to vector<128x512xbf16>
    %20 = arith.mulf %19, %18 : vector<128x512xbf16>
    %21 = arith.mulf %8, %20 : vector<128x512xbf16>
    %c0_10 = arith.constant 0 : index
    %c0_11 = arith.constant 0 : index
    %22 = vector.load %arg5[%c0_10, %c0_11] : memref<512x128xbf16, #tpu.memory_space<vmem>>, vector<512x128xbf16>
    %cst_12 = arith.constant dense<0.000000e+00> : vector<128x128xf32>
    %23 = tpu.matmul %21, %22, %cst_12 {dimension_numbers = #tpu.dot_dimension_numbers<[1], [0], [0], [1], [0, 0, 1, 1], [], []>} : vector<128x512xbf16>, vector<512x128xbf16>, vector<128x128xf32> -> vector<128x128xf32>
    %24 = arith.truncf %23 : vector<128x128xf32> to vector<128x128xbf16>
    %c0_13 = arith.constant 0 : index
    %c0_14 = arith.constant 0 : index
    %25 = vector.load %arg6[%c0_13, %c0_14] : memref<1x128xbf16, #tpu.memory_space<vmem>>, vector<1x128xbf16>
    %26 = vector.broadcast %25 : vector<1x128xbf16> to vector<128x128xbf16>
    %27 = arith.addf %24, %26 : vector<128x128xbf16>
    %28 = math.tanh %27 : vector<128x128xbf16>
    %c0_15 = arith.constant 0 : index
    %c0_16 = arith.constant 0 : index
    %29 = vector.load %arg7[%c0_15, %c0_16] : memref<1x128xbf16, #tpu.memory_space<vmem>>, vector<1x128xbf16>
    %cst_17 = arith.constant dense<0.000000e+00> : vector<1x128xf32>
    %30 = tpu.matmul %29, %28, %cst_17 {dimension_numbers = #tpu.dot_dimension_numbers<[1], [1], [0], [0], [0, 0, 1, 0], [], []>} : vector<1x128xbf16>, vector<128x128xbf16>, vector<1x128xf32> -> vector<1x128xf32>
    %c128_i32 = arith.constant 128 : i32
    %31 = arith.muli %arg1, %c128_i32 : i32
    %c320_i32 = arith.constant 320 : i32
    %32 = arith.subi %c320_i32, %31 : i32
    %33 = tpu.iota {dimensions = array<i32: 1>} : vector<1x128xi32>
    %34 = vector.broadcast %32 : i32 to vector<1x128xi32>
    %35 = arith.cmpi slt, %33, %34 : vector<1x128xi32>
    %cst_18 = arith.constant -1.000000e+30 : f32
    %36 = vector.broadcast %cst_18 : f32 to vector<1x128xf32>
    %37 = arith.select %35, %30, %36 : vector<1x128xi1>, vector<1x128xf32>
    %c0_i32 = arith.constant 0 : i32
    %38 = arith.cmpi eq, %arg1, %c0_i32 : i32
    %39 = arith.extui %38 : i1 to i32
    %c0_i32_19 = arith.constant 0 : i32
    %40 = arith.cmpi ne, %39, %c0_i32_19 : i32
    scf.if %40 {
      %cst_36 = arith.constant 0xFF800000 : f32
      %67 = vector.broadcast %cst_36 : f32 to vector<1x1xf32>
      %c0_37 = arith.constant 0 : index
      %c0_38 = arith.constant 0 : index
      %68 = vector.load %arg9[%c0_37, %c0_38] : memref<1x1xf32, #tpu.memory_space<vmem>>, vector<1x1xf32>
      tpu.vector_store %arg9[%c0_37, %c0_38], %67 {strides = array<i32>} : memref<1x1xf32, #tpu.memory_space<vmem>>, vector<1x1xf32>,
      %cst_39 = arith.constant 0.000000e+00 : f32
      %69 = vector.broadcast %cst_39 : f32 to vector<1x1xf32>
      %c0_40 = arith.constant 0 : index
      %c0_41 = arith.constant 0 : index
      %70 = vector.load %arg10[%c0_40, %c0_41] : memref<1x1xf32, #tpu.memory_space<vmem>>, vector<1x1xf32>
      tpu.vector_store %arg10[%c0_40, %c0_41], %69 {strides = array<i32>} : memref<1x1xf32, #tpu.memory_space<vmem>>, vector<1x1xf32>,
      %cst_42 = arith.constant 0.000000e+00 : f32
      %71 = vector.broadcast %cst_42 : f32 to vector<1x512xf32>
      %c0_43 = arith.constant 0 : index
      %c0_44 = arith.constant 0 : index
      %72 = vector.load %arg11[%c0_43, %c0_44] : memref<1x512xf32, #tpu.memory_space<vmem>>, vector<1x512xf32>
      tpu.vector_store %arg11[%c0_43, %c0_44], %71 {strides = array<i32>} : memref<1x512xf32, #tpu.memory_space<vmem>>, vector<1x512xf32>,
    } else {
    }
    %c0_20 = arith.constant 0 : index
    %c0_21 = arith.constant 0 : index
    %41 = vector.load %arg9[%c0_20, %c0_21] : memref<1x1xf32, #tpu.memory_space<vmem>>, vector<1x1xf32>
    %cst_22 = arith.constant dense<0xFF800000> : vector<1xf32>
    %42 = vector.multi_reduction <maximumf>, %37, %cst_22 [1] : vector<1x128xf32> to vector<1xf32>
    %43 = vector.shape_cast %42 : vector<1xf32> to vector<1x1xf32>
    %44 = arith.maximumf %41, %43 : vector<1x1xf32>
    %45 = arith.subf %41, %44 : vector<1x1xf32>
    %46 = math.exp %45 : vector<1x1xf32>
    %47 = vector.broadcast %44 : vector<1x1xf32> to vector<1x128xf32>
    %48 = arith.subf %37, %47 : vector<1x128xf32>
    %49 = math.exp %48 : vector<1x128xf32>
    %c0_23 = arith.constant 0 : index
    %c0_24 = arith.constant 0 : index
    %50 = vector.load %arg10[%c0_23, %c0_24] : memref<1x1xf32, #tpu.memory_space<vmem>>, vector<1x1xf32>
    %51 = arith.mulf %46, %50 : vector<1x1xf32>
    %cst_25 = arith.constant dense<0.000000e+00> : vector<1xf32>
    %52 = vector.multi_reduction <add>, %49, %cst_25 [1] : vector<1x128xf32> to vector<1xf32>
    %53 = vector.shape_cast %52 : vector<1xf32> to vector<1x1xf32>
    %54 = arith.addf %51, %53 : vector<1x1xf32>
    %c0_26 = arith.constant 0 : index
    %c0_27 = arith.constant 0 : index
    %55 = vector.load %arg10[%c0_26, %c0_27] : memref<1x1xf32, #tpu.memory_space<vmem>>, vector<1x1xf32>
    tpu.vector_store %arg10[%c0_26, %c0_27], %54 {strides = array<i32>} : memref<1x1xf32, #tpu.memory_space<vmem>>, vector<1x1xf32>,
    %56 = arith.truncf %49 : vector<1x128xf32> to vector<1x128xbf16>
    %cst_28 = arith.constant dense<0.000000e+00> : vector<1x512xf32>
    %57 = tpu.matmul %56, %21, %cst_28 {dimension_numbers = #tpu.dot_dimension_numbers<[1], [0], [0], [1], [0, 0, 1, 1], [], []>} : vector<1x128xbf16>, vector<128x512xbf16>, vector<1x512xf32> -> vector<1x512xf32>
    %c0_29 = arith.constant 0 : index
    %c0_30 = arith.constant 0 : index
    %58 = vector.load %arg11[%c0_29, %c0_30] : memref<1x512xf32, #tpu.memory_space<vmem>>, vector<1x512xf32>
    %59 = vector.broadcast %46 : vector<1x1xf32> to vector<1x512xf32>
    %60 = arith.mulf %59, %58 : vector<1x512xf32>
    %61 = arith.addf %60, %57 : vector<1x512xf32>
    %c0_31 = arith.constant 0 : index
    %c0_32 = arith.constant 0 : index
    %62 = vector.load %arg11[%c0_31, %c0_32] : memref<1x512xf32, #tpu.memory_space<vmem>>, vector<1x512xf32>
    tpu.vector_store %arg11[%c0_31, %c0_32], %61 {strides = array<i32>} : memref<1x512xf32, #tpu.memory_space<vmem>>, vector<1x512xf32>,
    %c0_33 = arith.constant 0 : index
    %c0_34 = arith.constant 0 : index
    %63 = vector.load %arg9[%c0_33, %c0_34] : memref<1x1xf32, #tpu.memory_space<vmem>>, vector<1x1xf32>
    tpu.vector_store %arg9[%c0_33, %c0_34], %44 {strides = array<i32>} : memref<1x1xf32, #tpu.memory_space<vmem>>, vector<1x1xf32>,
    %c2_i32 = arith.constant 2 : i32
    %64 = arith.cmpi eq, %arg1, %c2_i32 : i32
    %65 = arith.extui %64 : i1 to i32
    %c0_i32_35 = arith.constant 0 : i32
    %66 = arith.cmpi ne, %65, %c0_i32_35 : i32
    scf.if %66 {
      %c0_36 = arith.constant 0 : index
      %c0_37 = arith.constant 0 : index
      %67 = vector.load %arg11[%c0_36, %c0_37] : memref<1x512xf32, #tpu.memory_space<vmem>>, vector<1x512xf32>
      %c0_38 = arith.constant 0 : index
      %c0_39 = arith.constant 0 : index
      %68 = vector.load %arg10[%c0_38, %c0_39] : memref<1x1xf32, #tpu.memory_space<vmem>>, vector<1x1xf32>
      %69 = vector.broadcast %68 : vector<1x1xf32> to vector<1x512xf32>
      %70 = arith.divf %67, %69 : vector<1x512xf32>
      %c0_40 = arith.constant 0 : index
      %c0_41 = arith.constant 0 : index
      %c0_42 = arith.constant 0 : index
      %71 = vector.load %arg8[%c0_40, %c0_41, %c0_42] : memref<1x1x512xf32, #tpu.memory_space<vmem>>, vector<1x1x512xf32>
      %72 = vector.shape_cast %71 : vector<1x1x512xf32> to vector<1x512xf32>
      %73 = vector.shape_cast %70 : vector<1x512xf32> to vector<1x1x512xf32>
      tpu.vector_store %arg8[%c0_40, %c0_41, %c0_42], %73 {strides = array<i32>} : memref<1x1x512xf32, #tpu.memory_space<vmem>>, vector<1x1x512xf32>,
    } else {
    }
    return
  }
  func.func @transform_0(%arg0: i32, %arg1: i32) -> (i32, i32, i32) {
    %c0_i32 = arith.constant 0 : i32
    %c0_i32_0 = arith.constant 0 : i32
    return %arg0, %arg1, %c0_i32 : i32, i32, i32
  }
  func.func @transform_1(%arg0: i32, %arg1: i32) -> (i32, i32) {
    %c0_i32 = arith.constant 0 : i32
    %c0_i32_0 = arith.constant 0 : i32
    %c0_i32_1 = arith.constant 0 : i32
    return %c0_i32, %c0_i32_0 : i32, i32
  }
  func.func @transform_2(%arg0: i32, %arg1: i32) -> (i32, i32) {
    %c0_i32 = arith.constant 0 : i32
    %c0_i32_0 = arith.constant 0 : i32
    %c0_i32_1 = arith.constant 0 : i32
    return %c0_i32, %c0_i32_0 : i32, i32
  }
  func.func @transform_3(%arg0: i32, %arg1: i32) -> (i32, i32) {
    %c0_i32 = arith.constant 0 : i32
    %c0_i32_0 = arith.constant 0 : i32
    %c0_i32_1 = arith.constant 0 : i32
    return %c0_i32, %c0_i32_0 : i32, i32
  }
  func.func @transform_4(%arg0: i32, %arg1: i32) -> (i32, i32) {
    %c0_i32 = arith.constant 0 : i32
    %c0_i32_0 = arith.constant 0 : i32
    %c0_i32_1 = arith.constant 0 : i32
    return %c0_i32, %c0_i32_0 : i32, i32
  }
  func.func @transform_5(%arg0: i32, %arg1: i32) -> (i32, i32) {
    %c0_i32 = arith.constant 0 : i32
    %c0_i32_0 = arith.constant 0 : i32
    %c0_i32_1 = arith.constant 0 : i32
    return %c0_i32, %c0_i32_0 : i32, i32
  }
  func.func @transform_6(%arg0: i32, %arg1: i32) -> (i32, i32, i32) {
    %c0_i32 = arith.constant 0 : i32
    %c0_i32_0 = arith.constant 0 : i32
    %c0_i32_1 = arith.constant 0 : i32
    return %arg0, %c0_i32, %c0_i32_0 : i32, i32, i32
  }
}

</mosaic_0001>

<llo_original>
// kernel: tpu_custom_call.1
$region0: #{tpu_custom_call.1}
  #allocation0 [shape = 'u32[]', space=smem, size = 0x4, offset = 0x4, fixed_abs, tag = 'smem constant byte address 0x4 - core index']
  #allocation1 [shape = 'u32[72,128]{1,0:T(1,128)}', space=vmem, size = 0x9000, scoped, tag = 'internal scratch']
  #allocation2 [shape = 'f32[1,1]{1,0:T(1,128)}', space=vmem, size = 0x200, scoped, tag = 'scratch operand']
  #allocation3 [shape = 'f32[1,1]{1,0:T(1,128)}', space=vmem, size = 0x200, scoped, tag = 'scratch operand']
  #allocation4 [shape = 'f32[1,512]{1,0:T(1,128)}', space=vmem, size = 0x800, scoped, tag = 'scratch operand']
  %s0 = inlined_call_operand.vmem [shape: f32[2,384,32], index: 0, kind: input, shape index: {}]
  %s1 = inlined_call_operand.vmem [shape: bf16[32,512], index: 1, kind: input, shape index: {}]
  %s2 = inlined_call_operand.vmem [shape: bf16[1,512], index: 2, kind: input, shape index: {}]
  %s3 = inlined_call_operand.vmem [shape: bf16[512,128], index: 3, kind: input, shape index: {}]
  %s4 = inlined_call_operand.vmem [shape: bf16[1,128], index: 4, kind: input, shape index: {}]
  %s5 = inlined_call_operand.vmem [shape: bf16[1,128], index: 5, kind: input, shape index: {}]
  %s6 = inlined_call_operand.hbm [shape: f32[2,1,512], index: 6, kind: output, shape index: {}]
  %s7 = sld [smem:[#allocation0]]
  $region65: #{tpu_custom_call.1} parent=0
    _
  %s9 = ssub.s32 1, %s7
  %s10 = scalar_select 0, %s9, %s7
  $region1: #{tpu_custom_call.1} parent=0
    #allocation5 [shape = 'u8[4096]{0}', space=vmem, size = 0x1000, scoped, tag = 'output window, operand 0']
    #allocation6 [shape = 's32[2]{0}', space=sflag, size = 0x8, scoped, tag = 'scoped memory for tpu_custom_call.1']
    %11 = vsyncpa [#allocation6], 0
    %s12 = scalar_lea.sflag [#allocation6], 1
    %13 = vsyncpa %s12, 0
    loop: start=0, step=1, limit=8
    $region2: #{tpu_custom_call.1} parent=1 // loop_pre_header
      _
    $region3: #{tpu_custom_call.1} parent=1 // loop_header
      %s15 = sphi 0, %s19
      %p16 = scmp.ge.s32.totalorder %s15, 8
      %s22 = sphi 0, %s34
      %s23 = sphi 0, %s30
      %s24 = sphi 0, %s22
      %s25 = sphi 0, %s23
      %s26 = sphi 0, %s24
      %s27 = sphi 0, %s25
      %s39 = sphi 0, %s41
      %s42 = sphi 0, %s39
      %s43 = sphi 0, %s42
      %s59 = sphi 0, %s43
      %s63 = sphi 0, %s63
      %s65 = sphi 0, %s63
      %s66 = sphi 0, %s65
      %s80 = sphi 0, %s66
      %s84 = sphi 0, %s84
      %s86 = sphi 0, %s84
      %s87 = sphi 0, %s86
      %s101 = sphi 0, %s87
      %s105 = sphi 0, %s105
      %s107 = sphi 0, %s105
      %s108 = sphi 0, %s107
      %s122 = sphi 0, %s108
      %s126 = sphi 0, %s126
      %s128 = sphi 0, %s126
      %s129 = sphi 0, %s128
      %s143 = sphi 0, %s129
      %s147 = sphi 0, %s147
      %s149 = sphi 0, %s147
      %s150 = sphi 0, %s149
      %s164 = sphi 0, %s150
      %s170 = sphi 0, %s172
      %s173 = sphi 0, %s170
      %s174 = sphi 0, %s173
      %s190 = sphi 0, %s174
    $region4: #{tpu_custom_call.1} parent=1 // loop_header_branch
      %18 = sbr.rel (%p16) target = $region8
    $region5: #{tpu_custom_call.1} parent=1 // loop_body
      %s20 = ssub.s32 %s15, 1
      %s21 = ssub.s32 %s15, 2
      %s28 = sadd.s32 1, %s23
      %p29 = scmp.ge.s32.totalorder %s28, 3
      %s30 = scalar_select %p29, 0, %s28
      %s31 = sadd.s32 1, %s22
      %s32 = scalar_select %p29, %s31, %s22
      %p33 = scmp.ge.s32.totalorder %s32, 2
      %s34 = scalar_select %p33, 0, %s32
      %s35 = ssub.s32 %s22, %s34
      %s36 = ssub.s32 %s23, %s30
      %s37 = sor.u32 %s35, %s36
      %p38 = scmp.eq.s32.totalorder %s37, 0
      %s40 = sadd.s32 %s39, 1
      %s41 = scalar_select %p38, %s39, %s40
      %p44 = pneg %p38
      %p45 = scmp.eq.s32.totalorder %s15, 5
      %p46 = por %p44, %p45
      %p47 = scmp.ne.s32.totalorder %s39, %s42
      %p48 = scmp.eq.s32.totalorder %s15, 0
      %p49 = por %p47, %p48
      %p50 = scmp.ne.s32.totalorder %s39, %s42
      %p51 = scmp.eq.s32.totalorder %s20, 5
      %p52 = por %p50, %p51
      %p53 = scmp.ne.s32.totalorder %s42, %s43
      %p54 = scmp.eq.s32.totalorder %s20, 0
      %p55 = por %p53, %p54
      %p56 = scmp.ne.s32.totalorder %s42, %s43
      %p57 = scmp.eq.s32.totalorder %s21, 5
      %p58 = por %p56, %p57
      %p60 = scmp.ne.s32.totalorder %s43, %s59
      %p61 = scmp.eq.s32.totalorder %s21, 0
      %p62 = por %p60, %p61
      %s64 = sadd.s32 %s63, 1
      %p67 = scmp.eq.s32.totalorder %s15, 5
      %p68 = scmp.ne.s32.totalorder %s63, %s65
      %p69 = scmp.eq.s32.totalorder %s15, 0
      %p70 = por %p68, %p69
      %p71 = scmp.ne.s32.totalorder %s63, %s65
      %p72 = scmp.eq.s32.totalorder %s20, 5
      %p73 = por %p71, %p72
      %p74 = scmp.ne.s32.totalorder %s65, %s66
      %p75 = scmp.eq.s32.totalorder %s20, 0
      %p76 = por %p74, %p75
      %p77 = scmp.ne.s32.totalorder %s65, %s66
      %p78 = scmp.eq.s32.totalorder %s21, 5
      %p79 = por %p77, %p78
      %p81 = scmp.ne.s32.totalorder %s66, %s80
      %p82 = scmp.eq.s32.totalorder %s21, 0
      %p83 = por %p81, %p82
      %s85 = sadd.s32 %s84, 1
      %p88 = scmp.eq.s32.totalorder %s15, 5
      %p89 = scmp.ne.s32.totalorder %s84, %s86
      %p90 = scmp.eq.s32.totalorder %s15, 0
      %p91 = por %p89, %p90
      %p92 = scmp.ne.s32.totalorder %s84, %s86
      %p93 = scmp.eq.s32.totalorder %s20, 5
      %p94 = por %p92, %p93
      %p95 = scmp.ne.s32.totalorder %s86, %s87
      %p96 = scmp.eq.s32.totalorder %s20, 0
      %p97 = por %p95, %p96
      %p98 = scmp.ne.s32.totalorder %s86, %s87
      %p99 = scmp.eq.s32.totalorder %s21, 5
      %p100 = por %p98, %p99
      %p102 = scmp.ne.s32.totalorder %s87, %s101
      %p103 = scmp.eq.s32.totalorder %s21, 0
      %p104 = por %p102, %p103
      %s106 = sadd.s32 %s105, 1
      %p109 = scmp.eq.s32.totalorder %s15, 5
      %p110 = scmp.ne.s32.totalorder %s105, %s107
      %p111 = scmp.eq.s32.totalorder %s15, 0
      %p112 = por %p110, %p111
      %p113 = scmp.ne.s32.totalorder %s105, %s107
      %p114 = scmp.eq.s32.totalorder %s20, 5
      %p115 = por %p113, %p114
      %p116 = scmp.ne.s32.totalorder %s107, %s108
      %p117 = scmp.eq.s32.totalorder %s20, 0
      %p118 = por %p116, %p117
      %p119 = scmp.ne.s32.totalorder %s107, %s108
      %p120 = scmp.eq.s32.totalorder %s21, 5
      %p121 = por %p119, %p120
      %p123 = scmp.ne.s32.totalorder %s108, %s122
      %p124 = scmp.eq.s32.totalorder %s21, 0
      %p125 = por %p123, %p124
      %s127 = sadd.s32 %s126, 1
      %p130 = scmp.eq.s32.totalorder %s15, 5
      %p131 = scmp.ne.s32.totalorder %s126, %s128
      %p132 = scmp.eq.s32.totalorder %s15, 0
      %p133 = por %p131, %p132
      %p134 = scmp.ne.s32.totalorder %s126, %s128
      %p135 = scmp.eq.s32.totalorder %s20, 5
      %p136 = por %p134, %p135
      %p137 = scmp.ne.s32.totalorder %s128, %s129
      %p138 = scmp.eq.s32.totalorder %s20, 0
      %p139 = por %p137, %p138
      %p140 = scmp.ne.s32.totalorder %s128, %s129
      %p141 = scmp.eq.s32.totalorder %s21, 5
      %p142 = por %p140, %p141
      %p144 = scmp.ne.s32.totalorder %s129, %s143
      %p145 = scmp.eq.s32.totalorder %s21, 0
      %p146 = por %p144, %p145
      %s148 = sadd.s32 %s147, 1
      %p151 = scmp.eq.s32.totalorder %s15, 5
      %p152 = scmp.ne.s32.totalorder %s147, %s149
      %p153 = scmp.eq.s32.totalorder %s15, 0
      %p154 = por %p152, %p153
      %p155 = scmp.ne.s32.totalorder %s147, %s149
      %p156 = scmp.eq.s32.totalorder %s20, 5
      %p157 = por %p155, %p156
      %p158 = scmp.ne.s32.totalorder %s149, %s150
      %p159 = scmp.eq.s32.totalorder %s20, 0
      %p160 = por %p158, %p159
      %p161 = scmp.ne.s32.totalorder %s149, %s150
      %p162 = scmp.eq.s32.totalorder %s21, 5
      %p163 = por %p161, %p162
      %p165 = scmp.ne.s32.totalorder %s150, %s164
      %p166 = scmp.eq.s32.totalorder %s21, 0
      %p167 = por %p165, %p166
      %s168 = ssub.s32 %s22, %s34
      %p169 = scmp.eq.s32.totalorder %s168, 0
      %s171 = sadd.s32 %s170, 1
      %s172 = scalar_select %p169, %s170, %s171
      %p175 = pneg %p169
      %p176 = scmp.eq.s32.totalorder %s15, 5
      %p177 = por %p175, %p176
      %p178 = scmp.ne.s32.totalorder %s170, %s173
      %p179 = scmp.eq.s32.totalorder %s15, 0
      %p180 = por %p178, %p179
      %p181 = scmp.ne.s32.totalorder %s170, %s173
      %p182 = scmp.eq.s32.totalorder %s20, 5
      %p183 = por %p181, %p182
      %p184 = scmp.ne.s32.totalorder %s173, %s174
      %p185 = scmp.eq.s32.totalorder %s20, 0
      %p186 = por %p184, %p185
      %p187 = scmp.ne.s32.totalorder %s173, %s174
      %p188 = scmp.eq.s32.totalorder %s21, 5
      %p189 = por %p187, %p188
      %p191 = scmp.ne.s32.totalorder %s174, %s190
      %p192 = scmp.eq.s32.totalorder %s21, 0
      %p193 = por %p191, %p192
      %p194 = scmp.le.s32.totalorder 1, %s15
      %p195 = scmp.lt.s32.totalorder %s15, 7
      %p196 = pnand %p194, %p195
      %p197 = pneg %p196
      // Predicated region
      $region9: #{tpu_custom_call.1} parent=5 // pred_check
        _
      $region10: #{tpu_custom_call.1} parent=5 // pred_check_branch
        %199 = sbr.rel (%p196) target = $region12
      $region11: #{tpu_custom_call.1} parent=5 // pred_region
        %s200 = ssub.s32 %s15, 1
        // Predicated region
        $region13: #{tpu_custom_call.1} parent=11 // pred_check
          %p201 = pneg %p76
        $region14: #{tpu_custom_call.1} parent=11 // pred_check_branch
          %203 = sbr.rel (%p201) target = $region16
        $region15: #{tpu_custom_call.1} parent=11 // pred_region
          _
        $region16: #{tpu_custom_call.1} parent=11 // pred_fallthru
          _
        // Predicated region
        $region17: #{tpu_custom_call.1} parent=11 // pred_check
          %p204 = pneg %p97
        $region18: #{tpu_custom_call.1} parent=11 // pred_check_branch
          %206 = sbr.rel (%p204) target = $region20
        $region19: #{tpu_custom_call.1} parent=11 // pred_region
          _
        $region20: #{tpu_custom_call.1} parent=11 // pred_fallthru
          _
        // Predicated region
        $region21: #{tpu_custom_call.1} parent=11 // pred_check
          %p207 = pneg %p118
        $region22: #{tpu_custom_call.1} parent=11 // pred_check_branch
          %209 = sbr.rel (%p207) target = $region24
        $region23: #{tpu_custom_call.1} parent=11 // pred_region
          _
        $region24: #{tpu_custom_call.1} parent=11 // pred_fallthru
          _
        // Predicated region
        $region25: #{tpu_custom_call.1} parent=11 // pred_check
          %p210 = pneg %p139
        $region26: #{tpu_custom_call.1} parent=11 // pred_check_branch
          %212 = sbr.rel (%p210) target = $region28
        $region27: #{tpu_custom_call.1} parent=11 // pred_region
          _
        $region28: #{tpu_custom_call.1} parent=11 // pred_fallthru
          _
        // Predicated region
        $region29: #{tpu_custom_call.1} parent=11 // pred_check
          %p213 = pneg %p160
        $region30: #{tpu_custom_call.1} parent=11 // pred_check_branch
          %215 = sbr.rel (%p213) target = $region32
        $region31: #{tpu_custom_call.1} parent=11 // pred_region
          _
        $region32: #{tpu_custom_call.1} parent=11 // pred_fallthru
          _
      $region12: #{tpu_custom_call.1} parent=5 // pred_fallthru
        _
      %p216 = scmp.lt.s32.totalorder %s15, 6
      // Predicated region
      $region33: #{tpu_custom_call.1} parent=5 // pred_check
        %p217 = pneg %p216
      $region34: #{tpu_custom_call.1} parent=5 // pred_check_branch
        %219 = sbr.rel (%p217) target = $region36
      $region35: #{tpu_custom_call.1} parent=5 // pred_region
        // Predicated region
        $region37: #{tpu_custom_call.1} parent=35 // pred_check
          %p220 = pneg %p49
        $region38: #{tpu_custom_call.1} parent=35 // pred_check_branch
          %222 = sbr.rel (%p220) target = $region40
        $region39: #{tpu_custom_call.1} parent=35 // pred_region
          %s223 = smul.u32 16, %s23
          %p224 = scmp.lt.s32.totalorder %s22, 1
          %s225 = scalar_select %p224, %s22, 1
          %p226 = scmp.lt.s32.totalorder %s223, 47
          %s227 = scalar_select %p226, %s223, 47
          %s228 = smul.addr %s225, 48
          %s229 = sadd.s32 %s227, %s228
          %s230 = smul.addr %s229, 8
          %s231 = scalar_lea.vmem %s0, %s230
          %s232 = smul.u32 16, %s23
        $region40: #{tpu_custom_call.1} parent=35 // pred_fallthru
          _
      $region36: #{tpu_custom_call.1} parent=5 // pred_fallthru
        _
      %p233 = scmp.le.s32.totalorder 1, %s15
      %p234 = scmp.lt.s32.totalorder %s15, 7
      %p235 = pnand %p233, %p234
      %p236 = pneg %p235
      // Predicated region
      $region41: #{tpu_custom_call.1} parent=5 // pred_check
        _
      $region42: #{tpu_custom_call.1} parent=5 // pred_check_branch
        %238 = sbr.rel (%p235) target = $region44
      $region43: #{tpu_custom_call.1} parent=5 // pred_region
        %s239 = ssub.s32 %s15, 1
        %s240 = smul.u32 16, %s25
        %p241 = scmp.lt.s32.totalorder %s24, 1
        %s242 = scalar_select %p241, %s24, 1
        %p243 = scmp.lt.s32.totalorder %s240, 47
        %s244 = scalar_select %p243, %s240, 47
        %s245 = smul.addr %s242, 48
        %s246 = sadd.s32 %s244, %s245
        %s247 = smul.addr %s246, 8
        %s248 = scalar_lea.vmem %s0, %s247
        %p249 = pneg %p55
        %p250 = pneg %p52
        %p251 = pneg %p76
        %p252 = pneg %p73
        %p253 = pneg %p97
        %p254 = pneg %p94
        %p255 = pneg %p118
        %p256 = pneg %p115
        %p257 = pneg %p139
        %p258 = pneg %p136
        %p259 = pneg %p160
        %p260 = pneg %p157
        %p261 = pneg %p186
        %p262 = pneg %p183
        %s263 = sand.u32 %s173, 1
        %s264 = scalar_lea.sflag [#allocation6], %s263
        %s265 = sand.u32 %s173, 1
        %s266 = smul.addr %s265, 4
        %s267 = scalar_lea.vmem [#allocation5], %s266
        %s268 = smul.u32 16, %s25
        %p269 = scmp.lt.s32.totalorder %s24, 1
        %s270 = scalar_select %p269, %s24, 1
        %p271 = scmp.lt.s32.totalorder %s268, 47
        %s272 = scalar_select %p271, %s268, 47
        %s273 = smul.addr %s270, 48
        %s274 = sadd.s32 %s272, %s273
        %s275 = smul.addr %s274, 8
        %s276 = scalar_lea.vmem %s0, %s275
        %s277 = smul.u32 16, %s25
        %v279 = vld [vmem:[%s276] sm:$0xff]
        %v280 = vld [vmem:[%s276 + $0x8] sm:$0xff]
        %v281 = vld [vmem:[%s276 + $0x10] sm:$0xff]
        %v282 = vld [vmem:[%s276 + $0x18] sm:$0xff]
        %v283 = vld [vmem:[%s276 + $0x20] sm:$0xff]
        %v284 = vld [vmem:[%s276 + $0x28] sm:$0xff]
        %v285 = vld [vmem:[%s276 + $0x30] sm:$0xff]
        %v286 = vld [vmem:[%s276 + $0x38] sm:$0xff]
        %v287 = vld [vmem:[%s276 + $0x40] sm:$0xff]
        %v288 = vld [vmem:[%s276 + $0x48] sm:$0xff]
        %v289 = vld [vmem:[%s276 + $0x50] sm:$0xff]
        %v290 = vld [vmem:[%s276 + $0x58] sm:$0xff]
        %v291 = vld [vmem:[%s276 + $0x60] sm:$0xff]
        %v292 = vld [vmem:[%s276 + $0x68] sm:$0xff]
        %v293 = vld [vmem:[%s276 + $0x70] sm:$0xff]
        %v294 = vld [vmem:[%s276 + $0x78] sm:$0xff]
        %v295 = vpack.c.bf16 %v280, %v279
        %v296 = vpack.c.bf16 %v282, %v281
        %v297 = vpack.c.bf16 %v284, %v283
        %v298 = vpack.c.bf16 %v286, %v285
        %v299 = vpack.c.bf16 %v288, %v287
        %v300 = vpack.c.bf16 %v290, %v289
        %v301 = vpack.c.bf16 %v292, %v291
        %v302 = vpack.c.bf16 %v294, %v293
        %v303 = vld [vmem:[%s1] sm:$0xff]
        %v304 = vld [vmem:[%s1 + $0x8] sm:$0xff]
        %v305 = vld [vmem:[%s1 + $0x10] sm:$0xff]
        %v306 = vld [vmem:[%s1 + $0x18] sm:$0xff]
        %v307 = vld [vmem:[%s1 + $0x20] sm:$0xff]
        %v308 = vld [vmem:[%s1 + $0x28] sm:$0xff]
        %v309 = vld [vmem:[%s1 + $0x30] sm:$0xff]
        %v310 = vld [vmem:[%s1 + $0x38] sm:$0xff]
        %v319 = vunpack.c.l.b16 %v303
        %v320 = vunpack.c.h.b16 %v303
        %v321 = vunpack.c.l.b16 %v304
        %v322 = vunpack.c.h.b16 %v304
        %v323 = vunpack.c.l.b16 %v305
        %v324 = vunpack.c.h.b16 %v305
        %v325 = vunpack.c.l.b16 %v306
        %v326 = vunpack.c.h.b16 %v306
        %v327 = vunpack.c.l.b16 %v307
        %v328 = vunpack.c.h.b16 %v307
        %v329 = vunpack.c.l.b16 %v308
        %v330 = vunpack.c.h.b16 %v308
        %v331 = vunpack.c.l.b16 %v309
        %v332 = vunpack.c.h.b16 %v309
        %v333 = vunpack.c.l.b16 %v310
        %v334 = vunpack.c.h.b16 %v310
        %v335 = vpack.c.b16 %v323, %v319
        %v336 = vpack.c.b16 %v324, %v320
        %v337 = vpack.c.b16 %v325, %v321
        %v338 = vpack.c.b16 %v326, %v322
        %v339 = vpack.c.b16 %v331, %v327
        %v340 = vpack.c.b16 %v332, %v328
        %v341 = vpack.c.b16 %v333, %v329
        %v342 = vpack.c.b16 %v334, %v330
        %vm351 = vcmask 261120
        %v353 = vsel %vm351, %v295, 0
        %v356 = vsel %vm351, %v296, 0
        %v359 = vsel %vm351, %v297, 0
        %v362 = vsel %vm351, %v298, 0
        %v365 = vsel %vm351, %v299, 0
        %v368 = vsel %vm351, %v300, 0
        %v371 = vsel %vm351, %v301, 0
        %v374 = vsel %vm351, %v302, 0
        %376 = vmatpush.bf16.msra.mxu0 0
        %377 = vmatpush.bf16.msra.mxu0 0
        %378 = vmatpush.bf16.msra.mxu0 0
        %379 = vmatpush.bf16.msra.mxu0 0
        %380 = vmatpush.bf16.msra.mxu0 0
        %381 = vmatpush.bf16.msra.mxu0 0
        %382 = vmatpush.bf16.msra.mxu0 %v339
        %383 = vmatpush.bf16.msra.mxu0 %v335
        %384 = vmatmul.bf16.gmra.mxu0 %v353
        %v385 = vpop.f32.mrf.mxu0
        %v386 = vadd.f32 0.0, %v385
        %v387 = vpop.f32.mrf.mxu0
        %v388 = vadd.f32 0.0, %v387
        %389 = vmatmul.bf16.gmra.mxu0 %v356
        %v390 = vpop.f32.mrf.mxu0
        %v391 = vadd.f32 0.0, %v390
        %v392 = vpop.f32.mrf.mxu0
        %v393 = vadd.f32 0.0, %v392
        %394 = vmatmul.bf16.gmra.mxu0 %v359
        %v395 = vpop.f32.mrf.mxu0
        %v396 = vadd.f32 0.0, %v395
        %v397 = vpop.f32.mrf.mxu0
        %v398 = vadd.f32 0.0, %v397
        %399 = vmatmul.bf16.gmra.mxu0 %v362
        %v400 = vpop.f32.mrf.mxu0
        %v401 = vadd.f32 0.0, %v400
        %v402 = vpop.f32.mrf.mxu0
        %v403 = vadd.f32 0.0, %v402
        %404 = vmatmul.bf16.gmra.mxu0 %v365
        %v405 = vpop.f32.mrf.mxu0
        %v406 = vadd.f32 0.0, %v405
        %v407 = vpop.f32.mrf.mxu0
        %v408 = vadd.f32 0.0, %v407
        %409 = vmatmul.bf16.gmra.mxu0 %v368
        %v410 = vpop.f32.mrf.mxu0
        %v411 = vadd.f32 0.0, %v410
        %v412 = vpop.f32.mrf.mxu0
        %v413 = vadd.f32 0.0, %v412
        %414 = vmatmul.bf16.gmra.mxu0 %v371
        %v415 = vpop.f32.mrf.mxu0
        %v416 = vadd.f32 0.0, %v415
        %v417 = vpop.f32.mrf.mxu0
        %v418 = vadd.f32 0.0, %v417
        %419 = vmatmul.bf16.gmra.mxu0 %v374
        %v420 = vpop.f32.mrf.mxu0
        %v421 = vadd.f32 0.0, %v420
        %v422 = vpop.f32.mrf.mxu0
        %v423 = vadd.f32 0.0, %v422
        %424 = vdwg.mxu0
        %425 = vmatpush.bf16.msra.mxu0 0
        %426 = vmatpush.bf16.msra.mxu0 0
        %427 = vmatpush.bf16.msra.mxu0 0
        %428 = vmatpush.bf16.msra.mxu0 0
        %429 = vmatpush.bf16.msra.mxu0 0
        %430 = vmatpush.bf16.msra.mxu0 0
        %431 = vmatpush.bf16.msra.mxu0 %v340
        %432 = vmatpush.bf16.msra.mxu0 %v336
        %433 = vmatmul.bf16.gmra.mxu0 %v353
        %v434 = vpop.f32.mrf.mxu0
        %v435 = vadd.f32 0.0, %v434
        %v436 = vpop.f32.mrf.mxu0
        %v437 = vadd.f32 0.0, %v436
        %438 = vmatmul.bf16.gmra.mxu0 %v356
        %v439 = vpop.f32.mrf.mxu0
        %v440 = vadd.f32 0.0, %v439
        %v441 = vpop.f32.mrf.mxu0
        %v442 = vadd.f32 0.0, %v441
        %443 = vmatmul.bf16.gmra.mxu0 %v359
        %v444 = vpop.f32.mrf.mxu0
        %v445 = vadd.f32 0.0, %v444
        %v446 = vpop.f32.mrf.mxu0
        %v447 = vadd.f32 0.0, %v446
        %448 = vmatmul.bf16.gmra.mxu0 %v362
        %v449 = vpop.f32.mrf.mxu0
        %v450 = vadd.f32 0.0, %v449
        %v451 = vpop.f32.mrf.mxu0
        %v452 = vadd.f32 0.0, %v451
        %453 = vmatmul.bf16.gmra.mxu0 %v365
        %v454 = vpop.f32.mrf.mxu0
        %v455 = vadd.f32 0.0, %v454
        %v456 = vpop.f32.mrf.mxu0
        %v457 = vadd.f32 0.0, %v456
        %458 = vmatmul.bf16.gmra.mxu0 %v368
        %v459 = vpop.f32.mrf.mxu0
        %v460 = vadd.f32 0.0, %v459
        %v461 = vpop.f32.mrf.mxu0
        %v462 = vadd.f32 0.0, %v461
        %463 = vmatmul.bf16.gmra.mxu0 %v371
        %v464 = vpop.f32.mrf.mxu0
        %v465 = vadd.f32 0.0, %v464
        %v466 = vpop.f32.mrf.mxu0
        %v467 = vadd.f32 0.0, %v466
        %468 = vmatmul.bf16.gmra.mxu0 %v374
        %v469 = vpop.f32.mrf.mxu0
        %v470 = vadd.f32 0.0, %v469
        %v471 = vpop.f32.mrf.mxu0
        %v472 = vadd.f32 0.0, %v471
        %473 = vdwg.mxu0
        %474 = vmatpush.bf16.msra.mxu0 0
        %475 = vmatpush.bf16.msra.mxu0 0
        %476 = vmatpush.bf16.msra.mxu0 0
        %477 = vmatpush.bf16.msra.mxu0 0
        %478 = vmatpush.bf16.msra.mxu0 0
        %479 = vmatpush.bf16.msra.mxu0 0
        %480 = vmatpush.bf16.msra.mxu0 %v341
        %481 = vmatpush.bf16.msra.mxu0 %v337
        %482 = vmatmul.bf16.gmra.mxu0 %v353
        %v483 = vpop.f32.mrf.mxu0
        %v484 = vadd.f32 0.0, %v483
        %v485 = vpop.f32.mrf.mxu0
        %v486 = vadd.f32 0.0, %v485
        %487 = vmatmul.bf16.gmra.mxu0 %v356
        %v488 = vpop.f32.mrf.mxu0
        %v489 = vadd.f32 0.0, %v488
        %v490 = vpop.f32.mrf.mxu0
        %v491 = vadd.f32 0.0, %v490
        %492 = vmatmul.bf16.gmra.mxu0 %v359
        %v493 = vpop.f32.mrf.mxu0
        %v494 = vadd.f32 0.0, %v493
        %v495 = vpop.f32.mrf.mxu0
        %v496 = vadd.f32 0.0, %v495
        %497 = vmatmul.bf16.gmra.mxu0 %v362
        %v498 = vpop.f32.mrf.mxu0
        %v499 = vadd.f32 0.0, %v498
        %v500 = vpop.f32.mrf.mxu0
        %v501 = vadd.f32 0.0, %v500
        %502 = vmatmul.bf16.gmra.mxu0 %v365
        %v503 = vpop.f32.mrf.mxu0
        %v504 = vadd.f32 0.0, %v503
        %v505 = vpop.f32.mrf.mxu0
        %v506 = vadd.f32 0.0, %v505
        %507 = vmatmul.bf16.gmra.mxu0 %v368
        %v508 = vpop.f32.mrf.mxu0
        %v509 = vadd.f32 0.0, %v508
        %v510 = vpop.f32.mrf.mxu0
        %v511 = vadd.f32 0.0, %v510
        %512 = vmatmul.bf16.gmra.mxu0 %v371
        %v513 = vpop.f32.mrf.mxu0
        %v514 = vadd.f32 0.0, %v513
        %v515 = vpop.f32.mrf.mxu0
        %v516 = vadd.f32 0.0, %v515
        %517 = vmatmul.bf16.gmra.mxu0 %v374
        %v518 = vpop.f32.mrf.mxu0
        %v519 = vadd.f32 0.0, %v518
        %v520 = vpop.f32.mrf.mxu0
        %v521 = vadd.f32 0.0, %v520
        %522 = vdwg.mxu0
        %523 = vmatpush.bf16.msra.mxu0 0
        %524 = vmatpush.bf16.msra.mxu0 0
        %525 = vmatpush.bf16.msra.mxu0 0
        %526 = vmatpush.bf16.msra.mxu0 0
        %527 = vmatpush.bf16.msra.mxu0 0
        %528 = vmatpush.bf16.msra.mxu0 0
        %529 = vmatpush.bf16.msra.mxu0 %v342
        %530 = vmatpush.bf16.msra.mxu0 %v338
        %531 = vmatmul.bf16.gmra.mxu0 %v353
        %v532 = vpop.f32.mrf.mxu0
        %v533 = vadd.f32 0.0, %v532
        %v534 = vpop.f32.mrf.mxu0
        %v535 = vadd.f32 0.0, %v534
        %536 = vmatmul.bf16.gmra.mxu0 %v356
        %v537 = vpop.f32.mrf.mxu0
        %v538 = vadd.f32 0.0, %v537
        %v539 = vpop.f32.mrf.mxu0
        %v540 = vadd.f32 0.0, %v539
        %541 = vmatmul.bf16.gmra.mxu0 %v359
        %v542 = vpop.f32.mrf.mxu0
        %v543 = vadd.f32 0.0, %v542
        %v544 = vpop.f32.mrf.mxu0
        %v545 = vadd.f32 0.0, %v544
        %546 = vmatmul.bf16.gmra.mxu0 %v362
        %v547 = vpop.f32.mrf.mxu0
        %v548 = vadd.f32 0.0, %v547
        %v549 = vpop.f32.mrf.mxu0
        %v550 = vadd.f32 0.0, %v549
        %551 = vmatmul.bf16.gmra.mxu0 %v365
        %v552 = vpop.f32.mrf.mxu0
        %v553 = vadd.f32 0.0, %v552
        %v554 = vpop.f32.mrf.mxu0
        %v555 = vadd.f32 0.0, %v554
        %556 = vmatmul.bf16.gmra.mxu0 %v368
        %v557 = vpop.f32.mrf.mxu0
        %v558 = vadd.f32 0.0, %v557
        %v559 = vpop.f32.mrf.mxu0
        %v560 = vadd.f32 0.0, %v559
        %561 = vmatmul.bf16.gmra.mxu0 %v371
        %v562 = vpop.f32.mrf.mxu0
        %v563 = vadd.f32 0.0, %v562
        %v564 = vpop.f32.mrf.mxu0
        %v565 = vadd.f32 0.0, %v564
        %566 = vmatmul.bf16.gmra.mxu0 %v374
        %v567 = vpop.f32.mrf.mxu0
        %v568 = vadd.f32 0.0, %v567
        %v569 = vpop.f32.mrf.mxu0
        %v570 = vadd.f32 0.0, %v569
        %571 = vdwg.mxu0
        %v572 = vpack.c.bf16 %v435, %v386
        %v573 = vpack.c.bf16 %v533, %v484
        %v574 = vpack.c.bf16 %v437, %v388
        %v575 = vpack.c.bf16 %v535, %v486
        %v576 = vpack.c.bf16 %v440, %v391
        %v577 = vpack.c.bf16 %v538, %v489
        %v578 = vpack.c.bf16 %v442, %v393
        %v579 = vpack.c.bf16 %v540, %v491
        %v580 = vpack.c.bf16 %v445, %v396
        %v581 = vpack.c.bf16 %v543, %v494
        %v582 = vpack.c.bf16 %v447, %v398
        %v583 = vpack.c.bf16 %v545, %v496
        %v584 = vpack.c.bf16 %v450, %v401
        %v585 = vpack.c.bf16 %v548, %v499
        %v586 = vpack.c.bf16 %v452, %v403
        %v587 = vpack.c.bf16 %v550, %v501
        %v588 = vpack.c.bf16 %v455, %v406
        %v589 = vpack.c.bf16 %v553, %v504
        %v590 = vpack.c.bf16 %v457, %v408
        %v591 = vpack.c.bf16 %v555, %v506
        %v592 = vpack.c.bf16 %v460, %v411
        %v593 = vpack.c.bf16 %v558, %v509
        %v594 = vpack.c.bf16 %v462, %v413
        %v595 = vpack.c.bf16 %v560, %v511
        %v596 = vpack.c.bf16 %v465, %v416
        %v597 = vpack.c.bf16 %v563, %v514
        %v598 = vpack.c.bf16 %v467, %v418
        %v599 = vpack.c.bf16 %v565, %v516
        %v600 = vpack.c.bf16 %v470, %v421
        %v601 = vpack.c.bf16 %v568, %v519
        %v602 = vpack.c.bf16 %v472, %v423
        %v603 = vpack.c.bf16 %v570, %v521
        %v604 = vld [vmem:[%s2] sm:$0xf]
        %606 = vst [vmem:[#allocation1] ss:$9 sm:$0xff] %v604
        %v607 = vld [vmem:[#allocation1] sm:$0xff]
        %v608 = vld [vmem:[#allocation1 + $0x9] sm:$0xff]
        %v609 = vld [vmem:[#allocation1 + $0x12] sm:$0xff]
        %v610 = vld [vmem:[#allocation1 + $0x1b] sm:$0xff]
        %v611 = vpack.i.b16 %v607, %v607
        %v613 = vperm.slane %v611, 0
        %v614 = vpack.i.b16 %v608, %v608
        %v616 = vperm.slane %v614, 0
        %v617 = vpack.i.b16 %v609, %v609
        %v619 = vperm.slane %v617, 0
        %v620 = vpack.i.b16 %v610, %v610
        %v622 = vperm.slane %v620, 0
        %v623 = vunpack.c.l.bf16 %v572
        %v624 = vunpack.c.h.bf16 %v572
        %v625 = vunpack.c.l.bf16 %v573
        %v626 = vunpack.c.h.bf16 %v573
        %v627 = vunpack.c.l.bf16 %v574
        %v628 = vunpack.c.h.bf16 %v574
        %v629 = vunpack.c.l.bf16 %v575
        %v630 = vunpack.c.h.bf16 %v575
        %v631 = vunpack.c.l.bf16 %v576
        %v632 = vunpack.c.h.bf16 %v576
        %v633 = vunpack.c.l.bf16 %v577
        %v634 = vunpack.c.h.bf16 %v577
        %v635 = vunpack.c.l.bf16 %v578
        %v636 = vunpack.c.h.bf16 %v578
        %v637 = vunpack.c.l.bf16 %v579
        %v638 = vunpack.c.h.bf16 %v579
        %v639 = vunpack.c.l.bf16 %v580
        %v640 = vunpack.c.h.bf16 %v580
        %v641 = vunpack.c.l.bf16 %v581
        %v642 = vunpack.c.h.bf16 %v581
        %v643 = vunpack.c.l.bf16 %v582
        %v644 = vunpack.c.h.bf16 %v582
        %v645 = vunpack.c.l.bf16 %v583
        %v646 = vunpack.c.h.bf16 %v583
        %v647 = vunpack.c.l.bf16 %v584
        %v648 = vunpack.c.h.bf16 %v584
        %v649 = vunpack.c.l.bf16 %v585
        %v650 = vunpack.c.h.bf16 %v585
        %v651 = vunpack.c.l.bf16 %v586
        %v652 = vunpack.c.h.bf16 %v586
        %v653 = vunpack.c.l.bf16 %v587
        %v654 = vunpack.c.h.bf16 %v587
        %v655 = vunpack.c.l.bf16 %v588
        %v656 = vunpack.c.h.bf16 %v588
        %v657 = vunpack.c.l.bf16 %v589
        %v658 = vunpack.c.h.bf16 %v589
        %v659 = vunpack.c.l.bf16 %v590
        %v660 = vunpack.c.h.bf16 %v590
        %v661 = vunpack.c.l.bf16 %v591
        %v662 = vunpack.c.h.bf16 %v591
        %v663 = vunpack.c.l.bf16 %v592
        %v664 = vunpack.c.h.bf16 %v592
        %v665 = vunpack.c.l.bf16 %v593
        %v666 = vunpack.c.h.bf16 %v593
        %v667 = vunpack.c.l.bf16 %v594
        %v668 = vunpack.c.h.bf16 %v594
        %v669 = vunpack.c.l.bf16 %v595
        %v670 = vunpack.c.h.bf16 %v595
        %v671 = vunpack.c.l.bf16 %v596
        %v672 = vunpack.c.h.bf16 %v596
        %v673 = vunpack.c.l.bf16 %v597
        %v674 = vunpack.c.h.bf16 %v597
        %v675 = vunpack.c.l.bf16 %v598
        %v676 = vunpack.c.h.bf16 %v598
        %v677 = vunpack.c.l.bf16 %v599
        %v678 = vunpack.c.h.bf16 %v599
        %v679 = vunpack.c.l.bf16 %v600
        %v680 = vunpack.c.h.bf16 %v600
        %v681 = vunpack.c.l.bf16 %v601
        %v682 = vunpack.c.h.bf16 %v601
        %v683 = vunpack.c.l.bf16 %v602
        %v684 = vunpack.c.h.bf16 %v602
        %v685 = vunpack.c.l.bf16 %v603
        %v686 = vunpack.c.h.bf16 %v603
        %v687 = vunpack.c.l.bf16 %v613
        %v688 = vunpack.c.l.bf16 %v616
        %v689 = vunpack.c.l.bf16 %v619
        %v690 = vunpack.c.l.bf16 %v622
        %v691 = vadd.f32 %v623, %v687
        %v692 = vadd.f32 %v624, %v688
        %v693 = vadd.f32 %v625, %v689
        %v694 = vadd.f32 %v626, %v690
        %v695 = vadd.f32 %v627, %v687
        %v696 = vadd.f32 %v628, %v688
        %v697 = vadd.f32 %v629, %v689
        %v698 = vadd.f32 %v630, %v690
        %v699 = vadd.f32 %v631, %v687
        %v700 = vadd.f32 %v632, %v688
        %v701 = vadd.f32 %v633, %v689
        %v702 = vadd.f32 %v634, %v690
        %v703 = vadd.f32 %v635, %v687
        %v704 = vadd.f32 %v636, %v688
        %v705 = vadd.f32 %v637, %v689
        %v706 = vadd.f32 %v638, %v690
        %v707 = vadd.f32 %v639, %v687
        %v708 = vadd.f32 %v640, %v688
        %v709 = vadd.f32 %v641, %v689
        %v710 = vadd.f32 %v642, %v690
        %v711 = vadd.f32 %v643, %v687
        %v712 = vadd.f32 %v644, %v688
        %v713 = vadd.f32 %v645, %v689
        %v714 = vadd.f32 %v646, %v690
        %v715 = vadd.f32 %v647, %v687
        %v716 = vadd.f32 %v648, %v688
        %v717 = vadd.f32 %v649, %v689
        %v718 = vadd.f32 %v650, %v690
        %v719 = vadd.f32 %v651, %v687
        %v720 = vadd.f32 %v652, %v688
        %v721 = vadd.f32 %v653, %v689
        %v722 = vadd.f32 %v654, %v690
        %v723 = vadd.f32 %v655, %v687
        %v724 = vadd.f32 %v656, %v688
        %v725 = vadd.f32 %v657, %v689
        %v726 = vadd.f32 %v658, %v690
        %v727 = vadd.f32 %v659, %v687
        %v728 = vadd.f32 %v660, %v688
        %v729 = vadd.f32 %v661, %v689
        %v730 = vadd.f32 %v662, %v690
        %v731 = vadd.f32 %v663, %v687
        %v732 = vadd.f32 %v664, %v688
        %v733 = vadd.f32 %v665, %v689
        %v734 = vadd.f32 %v666, %v690
        %v735 = vadd.f32 %v667, %v687
        %v736 = vadd.f32 %v668, %v688
        %v737 = vadd.f32 %v669, %v689
        %v738 = vadd.f32 %v670, %v690
        %v739 = vadd.f32 %v671, %v687
        %v740 = vadd.f32 %v672, %v688
        %v741 = vadd.f32 %v673, %v689
        %v742 = vadd.f32 %v674, %v690
        %v743 = vadd.f32 %v675, %v687
        %v744 = vadd.f32 %v676, %v688
        %v745 = vadd.f32 %v677, %v689
        %v746 = vadd.f32 %v678, %v690
        %v747 = vadd.f32 %v679, %v687
        %v748 = vadd.f32 %v680, %v688
        %v749 = vadd.f32 %v681, %v689
        %v750 = vadd.f32 %v682, %v690
        %v751 = vadd.f32 %v683, %v687
        %v752 = vadd.f32 %v684, %v688
        %v753 = vadd.f32 %v685, %v689
        %v754 = vadd.f32 %v686, %v690
        %v755 = vpack.c.bf16 %v692, %v691
        %v756 = vpack.c.bf16 %v694, %v693
        %v757 = vpack.c.bf16 %v696, %v695
        %v758 = vpack.c.bf16 %v698, %v697
        %v759 = vpack.c.bf16 %v700, %v699
        %v760 = vpack.c.bf16 %v702, %v701
        %v761 = vpack.c.bf16 %v704, %v703
        %v762 = vpack.c.bf16 %v706, %v705
        %v763 = vpack.c.bf16 %v708, %v707
        %v764 = vpack.c.bf16 %v710, %v709
        %v765 = vpack.c.bf16 %v712, %v711
        %v766 = vpack.c.bf16 %v714, %v713
        %v767 = vpack.c.bf16 %v716, %v715
        %v768 = vpack.c.bf16 %v718, %v717
        %v769 = vpack.c.bf16 %v720, %v719
        %v770 = vpack.c.bf16 %v722, %v721
        %v771 = vpack.c.bf16 %v724, %v723
        %v772 = vpack.c.bf16 %v726, %v725
        %v773 = vpack.c.bf16 %v728, %v727
        %v774 = vpack.c.bf16 %v730, %v729
        %v775 = vpack.c.bf16 %v732, %v731
        %v776 = vpack.c.bf16 %v734, %v733
        %v777 = vpack.c.bf16 %v736, %v735
        %v778 = vpack.c.bf16 %v738, %v737
        %v779 = vpack.c.bf16 %v740, %v739
        %v780 = vpack.c.bf16 %v742, %v741
        %v781 = vpack.c.bf16 %v744, %v743
        %v782 = vpack.c.bf16 %v746, %v745
        %v783 = vpack.c.bf16 %v748, %v747
        %v784 = vpack.c.bf16 %v750, %v749
        %v785 = vpack.c.bf16 %v752, %v751
        %v786 = vpack.c.bf16 %v754, %v753
        %v787 = vunpack.c.l.bf16 %v755
        %v788 = vunpack.c.h.bf16 %v755
        %v789 = vunpack.c.l.bf16 %v756
        %v790 = vunpack.c.h.bf16 %v756
        %v791 = vunpack.c.l.bf16 %v757
        %v792 = vunpack.c.h.bf16 %v757
        %v793 = vunpack.c.l.bf16 %v758
        %v794 = vunpack.c.h.bf16 %v758
        %v795 = vunpack.c.l.bf16 %v759
        %v796 = vunpack.c.h.bf16 %v759
        %v797 = vunpack.c.l.bf16 %v760
        %v798 = vunpack.c.h.bf16 %v760
        %v799 = vunpack.c.l.bf16 %v761
        %v800 = vunpack.c.h.bf16 %v761
        %v801 = vunpack.c.l.bf16 %v762
        %v802 = vunpack.c.h.bf16 %v762
        %v803 = vunpack.c.l.bf16 %v763
        %v804 = vunpack.c.h.bf16 %v763
        %v805 = vunpack.c.l.bf16 %v764
        %v806 = vunpack.c.h.bf16 %v764
        %v807 = vunpack.c.l.bf16 %v765
        %v808 = vunpack.c.h.bf16 %v765
        %v809 = vunpack.c.l.bf16 %v766
        %v810 = vunpack.c.h.bf16 %v766
        %v811 = vunpack.c.l.bf16 %v767
        %v812 = vunpack.c.h.bf16 %v767
        %v813 = vunpack.c.l.bf16 %v768
        %v814 = vunpack.c.h.bf16 %v768
        %v815 = vunpack.c.l.bf16 %v769
        %v816 = vunpack.c.h.bf16 %v769
        %v817 = vunpack.c.l.bf16 %v770
        %v818 = vunpack.c.h.bf16 %v770
        %v819 = vunpack.c.l.bf16 %v771
        %v820 = vunpack.c.h.bf16 %v771
        %v821 = vunpack.c.l.bf16 %v772
        %v822 = vunpack.c.h.bf16 %v772
        %v823 = vunpack.c.l.bf16 %v773
        %v824 = vunpack.c.h.bf16 %v773
        %v825 = vunpack.c.l.bf16 %v774
        %v826 = vunpack.c.h.bf16 %v774
        %v827 = vunpack.c.l.bf16 %v775
        %v828 = vunpack.c.h.bf16 %v775
        %v829 = vunpack.c.l.bf16 %v776
        %v830 = vunpack.c.h.bf16 %v776
        %v831 = vunpack.c.l.bf16 %v777
        %v832 = vunpack.c.h.bf16 %v777
        %v833 = vunpack.c.l.bf16 %v778
        %v834 = vunpack.c.h.bf16 %v778
        %v835 = vunpack.c.l.bf16 %v779
        %v836 = vunpack.c.h.bf16 %v779
        %v837 = vunpack.c.l.bf16 %v780
        %v838 = vunpack.c.h.bf16 %v780
        %v839 = vunpack.c.l.bf16 %v781
        %v840 = vunpack.c.h.bf16 %v781
        %v841 = vunpack.c.l.bf16 %v782
        %v842 = vunpack.c.h.bf16 %v782
        %v843 = vunpack.c.l.bf16 %v783
        %v844 = vunpack.c.h.bf16 %v783
        %v845 = vunpack.c.l.bf16 %v784
        %v846 = vunpack.c.h.bf16 %v784
        %v847 = vunpack.c.l.bf16 %v785
        %v848 = vunpack.c.h.bf16 %v785
        %v849 = vunpack.c.l.bf16 %v786
        %v850 = vunpack.c.h.bf16 %v786
        %v851 = vmul.f32 %v787, %v787
        %v852 = vmul.f32 %v788, %v788
        %v853 = vmul.f32 %v789, %v789
        %v854 = vmul.f32 %v790, %v790
        %v855 = vmul.f32 %v791, %v791
        %v856 = vmul.f32 %v792, %v792
        %v857 = vmul.f32 %v793, %v793
        %v858 = vmul.f32 %v794, %v794
        %v859 = vmul.f32 %v795, %v795
        %v860 = vmul.f32 %v796, %v796
        %v861 = vmul.f32 %v797, %v797
        %v862 = vmul.f32 %v798, %v798
        %v863 = vmul.f32 %v799, %v799
        %v864 = vmul.f32 %v800, %v800
        %v865 = vmul.f32 %v801, %v801
        %v866 = vmul.f32 %v802, %v802
        %v867 = vmul.f32 %v803, %v803
        %v868 = vmul.f32 %v804, %v804
        %v869 = vmul.f32 %v805, %v805
        %v870 = vmul.f32 %v806, %v806
        %v871 = vmul.f32 %v807, %v807
        %v872 = vmul.f32 %v808, %v808
        %v873 = vmul.f32 %v809, %v809
        %v874 = vmul.f32 %v810, %v810
        %v875 = vmul.f32 %v811, %v811
        %v876 = vmul.f32 %v812, %v812
        %v877 = vmul.f32 %v813, %v813
        %v878 = vmul.f32 %v814, %v814
        %v879 = vmul.f32 %v815, %v815
        %v880 = vmul.f32 %v816, %v816
        %v881 = vmul.f32 %v817, %v817
        %v882 = vmul.f32 %v818, %v818
        %v883 = vmul.f32 %v819, %v819
        %v884 = vmul.f32 %v820, %v820
        %v885 = vmul.f32 %v821, %v821
        %v886 = vmul.f32 %v822, %v822
        %v887 = vmul.f32 %v823, %v823
        %v888 = vmul.f32 %v824, %v824
        %v889 = vmul.f32 %v825, %v825
        %v890 = vmul.f32 %v826, %v826
        %v891 = vmul.f32 %v827, %v827
        %v892 = vmul.f32 %v828, %v828
        %v893 = vmul.f32 %v829, %v829
        %v894 = vmul.f32 %v830, %v830
        %v895 = vmul.f32 %v831, %v831
        %v896 = vmul.f32 %v832, %v832
        %v897 = vmul.f32 %v833, %v833
        %v898 = vmul.f32 %v834, %v834
        %v899 = vmul.f32 %v835, %v835
        %v900 = vmul.f32 %v836, %v836
        %v901 = vmul.f32 %v837, %v837
        %v902 = vmul.f32 %v838, %v838
        %v903 = vmul.f32 %v839, %v839
        %v904 = vmul.f32 %v840, %v840
        %v905 = vmul.f32 %v841, %v841
        %v906 = vmul.f32 %v842, %v842
        %v907 = vmul.f32 %v843, %v843
        %v908 = vmul.f32 %v844, %v844
        %v909 = vmul.f32 %v845, %v845
        %v910 = vmul.f32 %v846, %v846
        %v911 = vmul.f32 %v847, %v847
        %v912 = vmul.f32 %v848, %v848
        %v913 = vmul.f32 %v849, %v849
        %v914 = vmul.f32 %v850, %v850
        %v915 = vpack.c.bf16 %v852, %v851
        %v916 = vpack.c.bf16 %v854, %v853
        %v917 = vpack.c.bf16 %v856, %v855
        %v918 = vpack.c.bf16 %v858, %v857
        %v919 = vpack.c.bf16 %v860, %v859
        %v920 = vpack.c.bf16 %v862, %v861
        %v921 = vpack.c.bf16 %v864, %v863
        %v922 = vpack.c.bf16 %v866, %v865
        %v923 = vpack.c.bf16 %v868, %v867
        %v924 = vpack.c.bf16 %v870, %v869
        %v925 = vpack.c.bf16 %v872, %v871
        %v926 = vpack.c.bf16 %v874, %v873
        %v927 = vpack.c.bf16 %v876, %v875
        %v928 = vpack.c.bf16 %v878, %v877
        %v929 = vpack.c.bf16 %v880, %v879
        %v930 = vpack.c.bf16 %v882, %v881
        %v931 = vpack.c.bf16 %v884, %v883
        %v932 = vpack.c.bf16 %v886, %v885
        %v933 = vpack.c.bf16 %v888, %v887
        %v934 = vpack.c.bf16 %v890, %v889
        %v935 = vpack.c.bf16 %v892, %v891
        %v936 = vpack.c.bf16 %v894, %v893
        %v937 = vpack.c.bf16 %v896, %v895
        %v938 = vpack.c.bf16 %v898, %v897
        %v939 = vpack.c.bf16 %v900, %v899
        %v940 = vpack.c.bf16 %v902, %v901
        %v941 = vpack.c.bf16 %v904, %v903
        %v942 = vpack.c.bf16 %v906, %v905
        %v943 = vpack.c.bf16 %v908, %v907
        %v944 = vpack.c.bf16 %v910, %v909
        %v945 = vpack.c.bf16 %v912, %v911
        %v946 = vpack.c.bf16 %v914, %v913
        %v947 = vunpack.c.l.bf16 %v915
        %v948 = vunpack.c.h.bf16 %v915
        %v949 = vunpack.c.l.bf16 %v916
        %v950 = vunpack.c.h.bf16 %v916
        %v951 = vunpack.c.l.bf16 %v917
        %v952 = vunpack.c.h.bf16 %v917
        %v953 = vunpack.c.l.bf16 %v918
        %v954 = vunpack.c.h.bf16 %v918
        %v955 = vunpack.c.l.bf16 %v919
        %v956 = vunpack.c.h.bf16 %v919
        %v957 = vunpack.c.l.bf16 %v920
        %v958 = vunpack.c.h.bf16 %v920
        %v959 = vunpack.c.l.bf16 %v921
        %v960 = vunpack.c.h.bf16 %v921
        %v961 = vunpack.c.l.bf16 %v922
        %v962 = vunpack.c.h.bf16 %v922
        %v963 = vunpack.c.l.bf16 %v923
        %v964 = vunpack.c.h.bf16 %v923
        %v965 = vunpack.c.l.bf16 %v924
        %v966 = vunpack.c.h.bf16 %v924
        %v967 = vunpack.c.l.bf16 %v925
        %v968 = vunpack.c.h.bf16 %v925
        %v969 = vunpack.c.l.bf16 %v926
        %v970 = vunpack.c.h.bf16 %v926
        %v971 = vunpack.c.l.bf16 %v927
        %v972 = vunpack.c.h.bf16 %v927
        %v973 = vunpack.c.l.bf16 %v928
        %v974 = vunpack.c.h.bf16 %v928
        %v975 = vunpack.c.l.bf16 %v929
        %v976 = vunpack.c.h.bf16 %v929
        %v977 = vunpack.c.l.bf16 %v930
        %v978 = vunpack.c.h.bf16 %v930
        %v979 = vunpack.c.l.bf16 %v931
        %v980 = vunpack.c.h.bf16 %v931
        %v981 = vunpack.c.l.bf16 %v932
        %v982 = vunpack.c.h.bf16 %v932
        %v983 = vunpack.c.l.bf16 %v933
        %v984 = vunpack.c.h.bf16 %v933
        %v985 = vunpack.c.l.bf16 %v934
        %v986 = vunpack.c.h.bf16 %v934
        %v987 = vunpack.c.l.bf16 %v935
        %v988 = vunpack.c.h.bf16 %v935
        %v989 = vunpack.c.l.bf16 %v936
        %v990 = vunpack.c.h.bf16 %v936
        %v991 = vunpack.c.l.bf16 %v937
        %v992 = vunpack.c.h.bf16 %v937
        %v993 = vunpack.c.l.bf16 %v938
        %v994 = vunpack.c.h.bf16 %v938
        %v995 = vunpack.c.l.bf16 %v939
        %v996 = vunpack.c.h.bf16 %v939
        %v997 = vunpack.c.l.bf16 %v940
        %v998 = vunpack.c.h.bf16 %v940
        %v999 = vunpack.c.l.bf16 %v941
        %v1000 = vunpack.c.h.bf16 %v941
        %v1001 = vunpack.c.l.bf16 %v942
        %v1002 = vunpack.c.h.bf16 %v942
        %v1003 = vunpack.c.l.bf16 %v943
        %v1004 = vunpack.c.h.bf16 %v943
        %v1005 = vunpack.c.l.bf16 %v944
        %v1006 = vunpack.c.h.bf16 %v944
        %v1007 = vunpack.c.l.bf16 %v945
        %v1008 = vunpack.c.h.bf16 %v945
        %v1009 = vunpack.c.l.bf16 %v946
        %v1010 = vunpack.c.h.bf16 %v946
        %v1011 = vmul.f32 %v787, %v947
        %v1012 = vmul.f32 %v788, %v948
        %v1013 = vmul.f32 %v789, %v949
        %v1014 = vmul.f32 %v790, %v950
        %v1015 = vmul.f32 %v791, %v951
        %v1016 = vmul.f32 %v792, %v952
        %v1017 = vmul.f32 %v793, %v953
        %v1018 = vmul.f32 %v794, %v954
        %v1019 = vmul.f32 %v795, %v955
        %v1020 = vmul.f32 %v796, %v956
        %v1021 = vmul.f32 %v797, %v957
        %v1022 = vmul.f32 %v798, %v958
        %v1023 = vmul.f32 %v799, %v959
        %v1024 = vmul.f32 %v800, %v960
        %v1025 = vmul.f32 %v801, %v961
        %v1026 = vmul.f32 %v802, %v962
        %v1027 = vmul.f32 %v803, %v963
        %v1028 = vmul.f32 %v804, %v964
        %v1029 = vmul.f32 %v805, %v965
        %v1030 = vmul.f32 %v806, %v966
        %v1031 = vmul.f32 %v807, %v967
        %v1032 = vmul.f32 %v808, %v968
        %v1033 = vmul.f32 %v809, %v969
        %v1034 = vmul.f32 %v810, %v970
        %v1035 = vmul.f32 %v811, %v971
        %v1036 = vmul.f32 %v812, %v972
        %v1037 = vmul.f32 %v813, %v973
        %v1038 = vmul.f32 %v814, %v974
        %v1039 = vmul.f32 %v815, %v975
        %v1040 = vmul.f32 %v816, %v976
        %v1041 = vmul.f32 %v817, %v977
        %v1042 = vmul.f32 %v818, %v978
        %v1043 = vmul.f32 %v819, %v979
        %v1044 = vmul.f32 %v820, %v980
        %v1045 = vmul.f32 %v821, %v981
        %v1046 = vmul.f32 %v822, %v982
        %v1047 = vmul.f32 %v823, %v983
        %v1048 = vmul.f32 %v824, %v984
        %v1049 = vmul.f32 %v825, %v985
        %v1050 = vmul.f32 %v826, %v986
        %v1051 = vmul.f32 %v827, %v987
        %v1052 = vmul.f32 %v828, %v988
        %v1053 = vmul.f32 %v829, %v989
        %v1054 = vmul.f32 %v830, %v990
        %v1055 = vmul.f32 %v831, %v991
        %v1056 = vmul.f32 %v832, %v992
        %v1057 = vmul.f32 %v833, %v993
        %v1058 = vmul.f32 %v834, %v994
        %v1059 = vmul.f32 %v835, %v995
        %v1060 = vmul.f32 %v836, %v996
        %v1061 = vmul.f32 %v837, %v997
        %v1062 = vmul.f32 %v838, %v998
        %v1063 = vmul.f32 %v839, %v999
        %v1064 = vmul.f32 %v840, %v1000
        %v1065 = vmul.f32 %v841, %v1001
        %v1066 = vmul.f32 %v842, %v1002
        %v1067 = vmul.f32 %v843, %v1003
        %v1068 = vmul.f32 %v844, %v1004
        %v1069 = vmul.f32 %v845, %v1005
        %v1070 = vmul.f32 %v846, %v1006
        %v1071 = vmul.f32 %v847, %v1007
        %v1072 = vmul.f32 %v848, %v1008
        %v1073 = vmul.f32 %v849, %v1009
        %v1074 = vmul.f32 %v850, %v1010
        %v1075 = vpack.c.bf16 %v1012, %v1011
        %v1076 = vpack.c.bf16 %v1014, %v1013
        %v1077 = vpack.c.bf16 %v1016, %v1015
        %v1078 = vpack.c.bf16 %v1018, %v1017
        %v1079 = vpack.c.bf16 %v1020, %v1019
        %v1080 = vpack.c.bf16 %v1022, %v1021
        %v1081 = vpack.c.bf16 %v1024, %v1023
        %v1082 = vpack.c.bf16 %v1026, %v1025
        %v1083 = vpack.c.bf16 %v1028, %v1027
        %v1084 = vpack.c.bf16 %v1030, %v1029
        %v1085 = vpack.c.bf16 %v1032, %v1031
        %v1086 = vpack.c.bf16 %v1034, %v1033
        %v1087 = vpack.c.bf16 %v1036, %v1035
        %v1088 = vpack.c.bf16 %v1038, %v1037
        %v1089 = vpack.c.bf16 %v1040, %v1039
        %v1090 = vpack.c.bf16 %v1042, %v1041
        %v1091 = vpack.c.bf16 %v1044, %v1043
        %v1092 = vpack.c.bf16 %v1046, %v1045
        %v1093 = vpack.c.bf16 %v1048, %v1047
        %v1094 = vpack.c.bf16 %v1050, %v1049
        %v1095 = vpack.c.bf16 %v1052, %v1051
        %v1096 = vpack.c.bf16 %v1054, %v1053
        %v1097 = vpack.c.bf16 %v1056, %v1055
        %v1098 = vpack.c.bf16 %v1058, %v1057
        %v1099 = vpack.c.bf16 %v1060, %v1059
        %v1100 = vpack.c.bf16 %v1062, %v1061
        %v1101 = vpack.c.bf16 %v1064, %v1063
        %v1102 = vpack.c.bf16 %v1066, %v1065
        %v1103 = vpack.c.bf16 %v1068, %v1067
        %v1104 = vpack.c.bf16 %v1070, %v1069
        %v1105 = vpack.c.bf16 %v1072, %v1071
        %v1106 = vpack.c.bf16 %v1074, %v1073
        %v1107 = vunpack.c.l.bf16 %v1075
        %v1108 = vunpack.c.h.bf16 %v1075
        %v1109 = vunpack.c.l.bf16 %v1076
        %v1110 = vunpack.c.h.bf16 %v1076
        %v1111 = vunpack.c.l.bf16 %v1077
        %v1112 = vunpack.c.h.bf16 %v1077
        %v1113 = vunpack.c.l.bf16 %v1078
        %v1114 = vunpack.c.h.bf16 %v1078
        %v1115 = vunpack.c.l.bf16 %v1079
        %v1116 = vunpack.c.h.bf16 %v1079
        %v1117 = vunpack.c.l.bf16 %v1080
        %v1118 = vunpack.c.h.bf16 %v1080
        %v1119 = vunpack.c.l.bf16 %v1081
        %v1120 = vunpack.c.h.bf16 %v1081
        %v1121 = vunpack.c.l.bf16 %v1082
        %v1122 = vunpack.c.h.bf16 %v1082
        %v1123 = vunpack.c.l.bf16 %v1083
        %v1124 = vunpack.c.h.bf16 %v1083
        %v1125 = vunpack.c.l.bf16 %v1084
        %v1126 = vunpack.c.h.bf16 %v1084
        %v1127 = vunpack.c.l.bf16 %v1085
        %v1128 = vunpack.c.h.bf16 %v1085
        %v1129 = vunpack.c.l.bf16 %v1086
        %v1130 = vunpack.c.h.bf16 %v1086
        %v1131 = vunpack.c.l.bf16 %v1087
        %v1132 = vunpack.c.h.bf16 %v1087
        %v1133 = vunpack.c.l.bf16 %v1088
        %v1134 = vunpack.c.h.bf16 %v1088
        %v1135 = vunpack.c.l.bf16 %v1089
        %v1136 = vunpack.c.h.bf16 %v1089
        %v1137 = vunpack.c.l.bf16 %v1090
        %v1138 = vunpack.c.h.bf16 %v1090
        %v1139 = vunpack.c.l.bf16 %v1091
        %v1140 = vunpack.c.h.bf16 %v1091
        %v1141 = vunpack.c.l.bf16 %v1092
        %v1142 = vunpack.c.h.bf16 %v1092
        %v1143 = vunpack.c.l.bf16 %v1093
        %v1144 = vunpack.c.h.bf16 %v1093
        %v1145 = vunpack.c.l.bf16 %v1094
        %v1146 = vunpack.c.h.bf16 %v1094
        %v1147 = vunpack.c.l.bf16 %v1095
        %v1148 = vunpack.c.h.bf16 %v1095
        %v1149 = vunpack.c.l.bf16 %v1096
        %v1150 = vunpack.c.h.bf16 %v1096
        %v1151 = vunpack.c.l.bf16 %v1097
        %v1152 = vunpack.c.h.bf16 %v1097
        %v1153 = vunpack.c.l.bf16 %v1098
        %v1154 = vunpack.c.h.bf16 %v1098
        %v1155 = vunpack.c.l.bf16 %v1099
        %v1156 = vunpack.c.h.bf16 %v1099
        %v1157 = vunpack.c.l.bf16 %v1100
        %v1158 = vunpack.c.h.bf16 %v1100
        %v1159 = vunpack.c.l.bf16 %v1101
        %v1160 = vunpack.c.h.bf16 %v1101
        %v1161 = vunpack.c.l.bf16 %v1102
        %v1162 = vunpack.c.h.bf16 %v1102
        %v1163 = vunpack.c.l.bf16 %v1103
        %v1164 = vunpack.c.h.bf16 %v1103
        %v1165 = vunpack.c.l.bf16 %v1104
        %v1166 = vunpack.c.h.bf16 %v1104
        %v1167 = vunpack.c.l.bf16 %v1105
        %v1168 = vunpack.c.h.bf16 %v1105
        %v1169 = vunpack.c.l.bf16 %v1106
        %v1170 = vunpack.c.h.bf16 %v1106
        %v1171 = vmul.f32 %v1107, 0.044677734
        %v1172 = vmul.f32 %v1108, 0.044677734
        %v1173 = vmul.f32 %v1109, 0.044677734
        %v1174 = vmul.f32 %v1110, 0.044677734
        %v1175 = vmul.f32 %v1111, 0.044677734
        %v1176 = vmul.f32 %v1112, 0.044677734
        %v1177 = vmul.f32 %v1113, 0.044677734
        %v1178 = vmul.f32 %v1114, 0.044677734
        %v1179 = vmul.f32 %v1115, 0.044677734
        %v1180 = vmul.f32 %v1116, 0.044677734
        %v1181 = vmul.f32 %v1117, 0.044677734
        %v1182 = vmul.f32 %v1118, 0.044677734
        %v1183 = vmul.f32 %v1119, 0.044677734
        %v1184 = vmul.f32 %v1120, 0.044677734
        %v1185 = vmul.f32 %v1121, 0.044677734
        %v1186 = vmul.f32 %v1122, 0.044677734
        %v1187 = vmul.f32 %v1123, 0.044677734
        %v1188 = vmul.f32 %v1124, 0.044677734
        %v1189 = vmul.f32 %v1125, 0.044677734
        %v1190 = vmul.f32 %v1126, 0.044677734
        %v1191 = vmul.f32 %v1127, 0.044677734
        %v1192 = vmul.f32 %v1128, 0.044677734
        %v1193 = vmul.f32 %v1129, 0.044677734
        %v1194 = vmul.f32 %v1130, 0.044677734
        %v1195 = vmul.f32 %v1131, 0.044677734
        %v1196 = vmul.f32 %v1132, 0.044677734
        %v1197 = vmul.f32 %v1133, 0.044677734
        %v1198 = vmul.f32 %v1134, 0.044677734
        %v1199 = vmul.f32 %v1135, 0.044677734
        %v1200 = vmul.f32 %v1136, 0.044677734
        %v1201 = vmul.f32 %v1137, 0.044677734
        %v1202 = vmul.f32 %v1138, 0.044677734
        %v1203 = vmul.f32 %v1139, 0.044677734
        %v1204 = vmul.f32 %v1140, 0.044677734
        %v1205 = vmul.f32 %v1141, 0.044677734
        %v1206 = vmul.f32 %v1142, 0.044677734
        %v1207 = vmul.f32 %v1143, 0.044677734
        %v1208 = vmul.f32 %v1144, 0.044677734
        %v1209 = vmul.f32 %v1145, 0.044677734
        %v1210 = vmul.f32 %v1146, 0.044677734
        %v1211 = vmul.f32 %v1147, 0.044677734
        %v1212 = vmul.f32 %v1148, 0.044677734
        %v1213 = vmul.f32 %v1149, 0.044677734
        %v1214 = vmul.f32 %v1150, 0.044677734
        %v1215 = vmul.f32 %v1151, 0.044677734
        %v1216 = vmul.f32 %v1152, 0.044677734
        %v1217 = vmul.f32 %v1153, 0.044677734
        %v1218 = vmul.f32 %v1154, 0.044677734
        %v1219 = vmul.f32 %v1155, 0.044677734
        %v1220 = vmul.f32 %v1156, 0.044677734
        %v1221 = vmul.f32 %v1157, 0.044677734
        %v1222 = vmul.f32 %v1158, 0.044677734
        %v1223 = vmul.f32 %v1159, 0.044677734
        %v1224 = vmul.f32 %v1160, 0.044677734
        %v1225 = vmul.f32 %v1161, 0.044677734
        %v1226 = vmul.f32 %v1162, 0.044677734
        %v1227 = vmul.f32 %v1163, 0.044677734
        %v1228 = vmul.f32 %v1164, 0.044677734
        %v1229 = vmul.f32 %v1165, 0.044677734
        %v1230 = vmul.f32 %v1166, 0.044677734
        %v1231 = vmul.f32 %v1167, 0.044677734
        %v1232 = vmul.f32 %v1168, 0.044677734
        %v1233 = vmul.f32 %v1169, 0.044677734
        %v1234 = vmul.f32 %v1170, 0.044677734
        %v1235 = vpack.c.bf16 %v1172, %v1171
        %v1236 = vpack.c.bf16 %v1174, %v1173
        %v1237 = vpack.c.bf16 %v1176, %v1175
        %v1238 = vpack.c.bf16 %v1178, %v1177
        %v1239 = vpack.c.bf16 %v1180, %v1179
        %v1240 = vpack.c.bf16 %v1182, %v1181
        %v1241 = vpack.c.bf16 %v1184, %v1183
        %v1242 = vpack.c.bf16 %v1186, %v1185
        %v1243 = vpack.c.bf16 %v1188, %v1187
        %v1244 = vpack.c.bf16 %v1190, %v1189
        %v1245 = vpack.c.bf16 %v1192, %v1191
        %v1246 = vpack.c.bf16 %v1194, %v1193
        %v1247 = vpack.c.bf16 %v1196, %v1195
        %v1248 = vpack.c.bf16 %v1198, %v1197
        %v1249 = vpack.c.bf16 %v1200, %v1199
        %v1250 = vpack.c.bf16 %v1202, %v1201
        %v1251 = vpack.c.bf16 %v1204, %v1203
        %v1252 = vpack.c.bf16 %v1206, %v1205
        %v1253 = vpack.c.bf16 %v1208, %v1207
        %v1254 = vpack.c.bf16 %v1210, %v1209
        %v1255 = vpack.c.bf16 %v1212, %v1211
        %v1256 = vpack.c.bf16 %v1214, %v1213
        %v1257 = vpack.c.bf16 %v1216, %v1215
        %v1258 = vpack.c.bf16 %v1218, %v1217
        %v1259 = vpack.c.bf16 %v1220, %v1219
        %v1260 = vpack.c.bf16 %v1222, %v1221
        %v1261 = vpack.c.bf16 %v1224, %v1223
        %v1262 = vpack.c.bf16 %v1226, %v1225
        %v1263 = vpack.c.bf16 %v1228, %v1227
        %v1264 = vpack.c.bf16 %v1230, %v1229
        %v1265 = vpack.c.bf16 %v1232, %v1231
        %v1266 = vpack.c.bf16 %v1234, %v1233
        %v1267 = vunpack.c.l.bf16 %v1235
        %v1268 = vunpack.c.h.bf16 %v1235
        %v1269 = vunpack.c.l.bf16 %v1236
        %v1270 = vunpack.c.h.bf16 %v1236
        %v1271 = vunpack.c.l.bf16 %v1237
        %v1272 = vunpack.c.h.bf16 %v1237
        %v1273 = vunpack.c.l.bf16 %v1238
        %v1274 = vunpack.c.h.bf16 %v1238
        %v1275 = vunpack.c.l.bf16 %v1239
        %v1276 = vunpack.c.h.bf16 %v1239
        %v1277 = vunpack.c.l.bf16 %v1240
        %v1278 = vunpack.c.h.bf16 %v1240
        %v1279 = vunpack.c.l.bf16 %v1241
        %v1280 = vunpack.c.h.bf16 %v1241
        %v1281 = vunpack.c.l.bf16 %v1242
        %v1282 = vunpack.c.h.bf16 %v1242
        %v1283 = vunpack.c.l.bf16 %v1243
        %v1284 = vunpack.c.h.bf16 %v1243
        %v1285 = vunpack.c.l.bf16 %v1244
        %v1286 = vunpack.c.h.bf16 %v1244
        %v1287 = vunpack.c.l.bf16 %v1245
        %v1288 = vunpack.c.h.bf16 %v1245
        %v1289 = vunpack.c.l.bf16 %v1246
        %v1290 = vunpack.c.h.bf16 %v1246
        %v1291 = vunpack.c.l.bf16 %v1247
        %v1292 = vunpack.c.h.bf16 %v1247
        %v1293 = vunpack.c.l.bf16 %v1248
        %v1294 = vunpack.c.h.bf16 %v1248
        %v1295 = vunpack.c.l.bf16 %v1249
        %v1296 = vunpack.c.h.bf16 %v1249
        %v1297 = vunpack.c.l.bf16 %v1250
        %v1298 = vunpack.c.h.bf16 %v1250
        %v1299 = vunpack.c.l.bf16 %v1251
        %v1300 = vunpack.c.h.bf16 %v1251
        %v1301 = vunpack.c.l.bf16 %v1252
        %v1302 = vunpack.c.h.bf16 %v1252
        %v1303 = vunpack.c.l.bf16 %v1253
        %v1304 = vunpack.c.h.bf16 %v1253
        %v1305 = vunpack.c.l.bf16 %v1254
        %v1306 = vunpack.c.h.bf16 %v1254
        %v1307 = vunpack.c.l.bf16 %v1255
        %v1308 = vunpack.c.h.bf16 %v1255
        %v1309 = vunpack.c.l.bf16 %v1256
        %v1310 = vunpack.c.h.bf16 %v1256
        %v1311 = vunpack.c.l.bf16 %v1257
        %v1312 = vunpack.c.h.bf16 %v1257
        %v1313 = vunpack.c.l.bf16 %v1258
        %v1314 = vunpack.c.h.bf16 %v1258
        %v1315 = vunpack.c.l.bf16 %v1259
        %v1316 = vunpack.c.h.bf16 %v1259
        %v1317 = vunpack.c.l.bf16 %v1260
        %v1318 = vunpack.c.h.bf16 %v1260
        %v1319 = vunpack.c.l.bf16 %v1261
        %v1320 = vunpack.c.h.bf16 %v1261
        %v1321 = vunpack.c.l.bf16 %v1262
        %v1322 = vunpack.c.h.bf16 %v1262
        %v1323 = vunpack.c.l.bf16 %v1263
        %v1324 = vunpack.c.h.bf16 %v1263
        %v1325 = vunpack.c.l.bf16 %v1264
        %v1326 = vunpack.c.h.bf16 %v1264
        %v1327 = vunpack.c.l.bf16 %v1265
        %v1328 = vunpack.c.h.bf16 %v1265
        %v1329 = vunpack.c.l.bf16 %v1266
        %v1330 = vunpack.c.h.bf16 %v1266
        %v1331 = vadd.f32 %v787, %v1267
        %v1332 = vadd.f32 %v788, %v1268
        %v1333 = vadd.f32 %v789, %v1269
        %v1334 = vadd.f32 %v790, %v1270
        %v1335 = vadd.f32 %v791, %v1271
        %v1336 = vadd.f32 %v792, %v1272
        %v1337 = vadd.f32 %v793, %v1273
        %v1338 = vadd.f32 %v794, %v1274
        %v1339 = vadd.f32 %v795, %v1275
        %v1340 = vadd.f32 %v796, %v1276
        %v1341 = vadd.f32 %v797, %v1277
        %v1342 = vadd.f32 %v798, %v1278
        %v1343 = vadd.f32 %v799, %v1279
        %v1344 = vadd.f32 %v800, %v1280
        %v1345 = vadd.f32 %v801, %v1281
        %v1346 = vadd.f32 %v802, %v1282
        %v1347 = vadd.f32 %v803, %v1283
        %v1348 = vadd.f32 %v804, %v1284
        %v1349 = vadd.f32 %v805, %v1285
        %v1350 = vadd.f32 %v806, %v1286
        %v1351 = vadd.f32 %v807, %v1287
        %v1352 = vadd.f32 %v808, %v1288
        %v1353 = vadd.f32 %v809, %v1289
        %v1354 = vadd.f32 %v810, %v1290
        %v1355 = vadd.f32 %v811, %v1291
        %v1356 = vadd.f32 %v812, %v1292
        %v1357 = vadd.f32 %v813, %v1293
        %v1358 = vadd.f32 %v814, %v1294
        %v1359 = vadd.f32 %v815, %v1295
        %v1360 = vadd.f32 %v816, %v1296
        %v1361 = vadd.f32 %v817, %v1297
        %v1362 = vadd.f32 %v818, %v1298
        %v1363 = vadd.f32 %v819, %v1299
        %v1364 = vadd.f32 %v820, %v1300
        %v1365 = vadd.f32 %v821, %v1301
        %v1366 = vadd.f32 %v822, %v1302
        %v1367 = vadd.f32 %v823, %v1303
        %v1368 = vadd.f32 %v824, %v1304
        %v1369 = vadd.f32 %v825, %v1305
        %v1370 = vadd.f32 %v826, %v1306
        %v1371 = vadd.f32 %v827, %v1307
        %v1372 = vadd.f32 %v828, %v1308
        %v1373 = vadd.f32 %v829, %v1309
        %v1374 = vadd.f32 %v830, %v1310
        %v1375 = vadd.f32 %v831, %v1311
        %v1376 = vadd.f32 %v832, %v1312
        %v1377 = vadd.f32 %v833, %v1313
        %v1378 = vadd.f32 %v834, %v1314
        %v1379 = vadd.f32 %v835, %v1315
        %v1380 = vadd.f32 %v836, %v1316
        %v1381 = vadd.f32 %v837, %v1317
        %v1382 = vadd.f32 %v838, %v1318
        %v1383 = vadd.f32 %v839, %v1319
        %v1384 = vadd.f32 %v840, %v1320
        %v1385 = vadd.f32 %v841, %v1321
        %v1386 = vadd.f32 %v842, %v1322
        %v1387 = vadd.f32 %v843, %v1323
        %v1388 = vadd.f32 %v844, %v1324
        %v1389 = vadd.f32 %v845, %v1325
        %v1390 = vadd.f32 %v846, %v1326
        %v1391 = vadd.f32 %v847, %v1327
        %v1392 = vadd.f32 %v848, %v1328
        %v1393 = vadd.f32 %v849, %v1329
        %v1394 = vadd.f32 %v850, %v1330
        %v1395 = vpack.c.bf16 %v1332, %v1331
        %v1396 = vpack.c.bf16 %v1334, %v1333
        %v1397 = vpack.c.bf16 %v1336, %v1335
        %v1398 = vpack.c.bf16 %v1338, %v1337
        %v1399 = vpack.c.bf16 %v1340, %v1339
        %v1400 = vpack.c.bf16 %v1342, %v1341
        %v1401 = vpack.c.bf16 %v1344, %v1343
        %v1402 = vpack.c.bf16 %v1346, %v1345
        %v1403 = vpack.c.bf16 %v1348, %v1347
        %v1404 = vpack.c.bf16 %v1350, %v1349
        %v1405 = vpack.c.bf16 %v1352, %v1351
        %v1406 = vpack.c.bf16 %v1354, %v1353
        %v1407 = vpack.c.bf16 %v1356, %v1355
        %v1408 = vpack.c.bf16 %v1358, %v1357
        %v1409 = vpack.c.bf16 %v1360, %v1359
        %v1410 = vpack.c.bf16 %v1362, %v1361
        %v1411 = vpack.c.bf16 %v1364, %v1363
        %v1412 = vpack.c.bf16 %v1366, %v1365
        %v1413 = vpack.c.bf16 %v1368, %v1367
        %v1414 = vpack.c.bf16 %v1370, %v1369
        %v1415 = vpack.c.bf16 %v1372, %v1371
        %v1416 = vpack.c.bf16 %v1374, %v1373
        %v1417 = vpack.c.bf16 %v1376, %v1375
        %v1418 = vpack.c.bf16 %v1378, %v1377
        %v1419 = vpack.c.bf16 %v1380, %v1379
        %v1420 = vpack.c.bf16 %v1382, %v1381
        %v1421 = vpack.c.bf16 %v1384, %v1383
        %v1422 = vpack.c.bf16 %v1386, %v1385
        %v1423 = vpack.c.bf16 %v1388, %v1387
        %v1424 = vpack.c.bf16 %v1390, %v1389
        %v1425 = vpack.c.bf16 %v1392, %v1391
        %v1426 = vpack.c.bf16 %v1394, %v1393
        %v1427 = vunpack.c.l.bf16 %v1395
        %v1428 = vunpack.c.h.bf16 %v1395
        %v1429 = vunpack.c.l.bf16 %v1396
        %v1430 = vunpack.c.h.bf16 %v1396
        %v1431 = vunpack.c.l.bf16 %v1397
        %v1432 = vunpack.c.h.bf16 %v1397
        %v1433 = vunpack.c.l.bf16 %v1398
        %v1434 = vunpack.c.h.bf16 %v1398
        %v1435 = vunpack.c.l.bf16 %v1399
        %v1436 = vunpack.c.h.bf16 %v1399
        %v1437 = vunpack.c.l.bf16 %v1400
        %v1438 = vunpack.c.h.bf16 %v1400
        %v1439 = vunpack.c.l.bf16 %v1401
        %v1440 = vunpack.c.h.bf16 %v1401
        %v1441 = vunpack.c.l.bf16 %v1402
        %v1442 = vunpack.c.h.bf16 %v1402
        %v1443 = vunpack.c.l.bf16 %v1403
        %v1444 = vunpack.c.h.bf16 %v1403
        %v1445 = vunpack.c.l.bf16 %v1404
        %v1446 = vunpack.c.h.bf16 %v1404
        %v1447 = vunpack.c.l.bf16 %v1405
        %v1448 = vunpack.c.h.bf16 %v1405
        %v1449 = vunpack.c.l.bf16 %v1406
        %v1450 = vunpack.c.h.bf16 %v1406
        %v1451 = vunpack.c.l.bf16 %v1407
        %v1452 = vunpack.c.h.bf16 %v1407
        %v1453 = vunpack.c.l.bf16 %v1408
        %v1454 = vunpack.c.h.bf16 %v1408
        %v1455 = vunpack.c.l.bf16 %v1409
        %v1456 = vunpack.c.h.bf16 %v1409
        %v1457 = vunpack.c.l.bf16 %v1410
        %v1458 = vunpack.c.h.bf16 %v1410
        %v1459 = vunpack.c.l.bf16 %v1411
        %v1460 = vunpack.c.h.bf16 %v1411
        %v1461 = vunpack.c.l.bf16 %v1412
        %v1462 = vunpack.c.h.bf16 %v1412
        %v1463 = vunpack.c.l.bf16 %v1413
        %v1464 = vunpack.c.h.bf16 %v1413
        %v1465 = vunpack.c.l.bf16 %v1414
        %v1466 = vunpack.c.h.bf16 %v1414
        %v1467 = vunpack.c.l.bf16 %v1415
        %v1468 = vunpack.c.h.bf16 %v1415
        %v1469 = vunpack.c.l.bf16 %v1416
        %v1470 = vunpack.c.h.bf16 %v1416
        %v1471 = vunpack.c.l.bf16 %v1417
        %v1472 = vunpack.c.h.bf16 %v1417
        %v1473 = vunpack.c.l.bf16 %v1418
        %v1474 = vunpack.c.h.bf16 %v1418
        %v1475 = vunpack.c.l.bf16 %v1419
        %v1476 = vunpack.c.h.bf16 %v1419
        %v1477 = vunpack.c.l.bf16 %v1420
        %v1478 = vunpack.c.h.bf16 %v1420
        %v1479 = vunpack.c.l.bf16 %v1421
        %v1480 = vunpack.c.h.bf16 %v1421
        %v1481 = vunpack.c.l.bf16 %v1422
        %v1482 = vunpack.c.h.bf16 %v1422
        %v1483 = vunpack.c.l.bf16 %v1423
        %v1484 = vunpack.c.h.bf16 %v1423
        %v1485 = vunpack.c.l.bf16 %v1424
        %v1486 = vunpack.c.h.bf16 %v1424
        %v1487 = vunpack.c.l.bf16 %v1425
        %v1488 = vunpack.c.h.bf16 %v1425
        %v1489 = vunpack.c.l.bf16 %v1426
        %v1490 = vunpack.c.h.bf16 %v1426
        %v1491 = vmul.f32 %v1427, 0.796875
        %v1492 = vmul.f32 %v1428, 0.796875
        %v1493 = vmul.f32 %v1429, 0.796875
        %v1494 = vmul.f32 %v1430, 0.796875
        %v1495 = vmul.f32 %v1431, 0.796875
        %v1496 = vmul.f32 %v1432, 0.796875
        %v1497 = vmul.f32 %v1433, 0.796875
        %v1498 = vmul.f32 %v1434, 0.796875
        %v1499 = vmul.f32 %v1435, 0.796875
        %v1500 = vmul.f32 %v1436, 0.796875
        %v1501 = vmul.f32 %v1437, 0.796875
        %v1502 = vmul.f32 %v1438, 0.796875
        %v1503 = vmul.f32 %v1439, 0.796875
        %v1504 = vmul.f32 %v1440, 0.796875
        %v1505 = vmul.f32 %v1441, 0.796875
        %v1506 = vmul.f32 %v1442, 0.796875
        %v1507 = vmul.f32 %v1443, 0.796875
        %v1508 = vmul.f32 %v1444, 0.796875
        %v1509 = vmul.f32 %v1445, 0.796875
        %v1510 = vmul.f32 %v1446, 0.796875
        %v1511 = vmul.f32 %v1447, 0.796875
        %v1512 = vmul.f32 %v1448, 0.796875
        %v1513 = vmul.f32 %v1449, 0.796875
        %v1514 = vmul.f32 %v1450, 0.796875
        %v1515 = vmul.f32 %v1451, 0.796875
        %v1516 = vmul.f32 %v1452, 0.796875
        %v1517 = vmul.f32 %v1453, 0.796875
        %v1518 = vmul.f32 %v1454, 0.796875
        %v1519 = vmul.f32 %v1455, 0.796875
        %v1520 = vmul.f32 %v1456, 0.796875
        %v1521 = vmul.f32 %v1457, 0.796875
        %v1522 = vmul.f32 %v1458, 0.796875
        %v1523 = vmul.f32 %v1459, 0.796875
        %v1524 = vmul.f32 %v1460, 0.796875
        %v1525 = vmul.f32 %v1461, 0.796875
        %v1526 = vmul.f32 %v1462, 0.796875
        %v1527 = vmul.f32 %v1463, 0.796875
        %v1528 = vmul.f32 %v1464, 0.796875
        %v1529 = vmul.f32 %v1465, 0.796875
        %v1530 = vmul.f32 %v1466, 0.796875
        %v1531 = vmul.f32 %v1467, 0.796875
        %v1532 = vmul.f32 %v1468, 0.796875
        %v1533 = vmul.f32 %v1469, 0.796875
        %v1534 = vmul.f32 %v1470, 0.796875
        %v1535 = vmul.f32 %v1471, 0.796875
        %v1536 = vmul.f32 %v1472, 0.796875
        %v1537 = vmul.f32 %v1473, 0.796875
        %v1538 = vmul.f32 %v1474, 0.796875
        %v1539 = vmul.f32 %v1475, 0.796875
        %v1540 = vmul.f32 %v1476, 0.796875
        %v1541 = vmul.f32 %v1477, 0.796875
        %v1542 = vmul.f32 %v1478, 0.796875
        %v1543 = vmul.f32 %v1479, 0.796875
        %v1544 = vmul.f32 %v1480, 0.796875
        %v1545 = vmul.f32 %v1481, 0.796875
        %v1546 = vmul.f32 %v1482, 0.796875
        %v1547 = vmul.f32 %v1483, 0.796875
        %v1548 = vmul.f32 %v1484, 0.796875
        %v1549 = vmul.f32 %v1485, 0.796875
        %v1550 = vmul.f32 %v1486, 0.796875
        %v1551 = vmul.f32 %v1487, 0.796875
        %v1552 = vmul.f32 %v1488, 0.796875
        %v1553 = vmul.f32 %v1489, 0.796875
        %v1554 = vmul.f32 %v1490, 0.796875
        %v1555 = vpack.c.bf16 %v1492, %v1491
        %v1556 = vpack.c.bf16 %v1494, %v1493
        %v1557 = vpack.c.bf16 %v1496, %v1495
        %v1558 = vpack.c.bf16 %v1498, %v1497
        %v1559 = vpack.c.bf16 %v1500, %v1499
        %v1560 = vpack.c.bf16 %v1502, %v1501
        %v1561 = vpack.c.bf16 %v1504, %v1503
        %v1562 = vpack.c.bf16 %v1506, %v1505
        %v1563 = vpack.c.bf16 %v1508, %v1507
        %v1564 = vpack.c.bf16 %v1510, %v1509
        %v1565 = vpack.c.bf16 %v1512, %v1511
        %v1566 = vpack.c.bf16 %v1514, %v1513
        %v1567 = vpack.c.bf16 %v1516, %v1515
        %v1568 = vpack.c.bf16 %v1518, %v1517
        %v1569 = vpack.c.bf16 %v1520, %v1519
        %v1570 = vpack.c.bf16 %v1522, %v1521
        %v1571 = vpack.c.bf16 %v1524, %v1523
        %v1572 = vpack.c.bf16 %v1526, %v1525
        %v1573 = vpack.c.bf16 %v1528, %v1527
        %v1574 = vpack.c.bf16 %v1530, %v1529
        %v1575 = vpack.c.bf16 %v1532, %v1531
        %v1576 = vpack.c.bf16 %v1534, %v1533
        %v1577 = vpack.c.bf16 %v1536, %v1535
        %v1578 = vpack.c.bf16 %v1538, %v1537
        %v1579 = vpack.c.bf16 %v1540, %v1539
        %v1580 = vpack.c.bf16 %v1542, %v1541
        %v1581 = vpack.c.bf16 %v1544, %v1543
        %v1582 = vpack.c.bf16 %v1546, %v1545
        %v1583 = vpack.c.bf16 %v1548, %v1547
        %v1584 = vpack.c.bf16 %v1550, %v1549
        %v1585 = vpack.c.bf16 %v1552, %v1551
        %v1586 = vpack.c.bf16 %v1554, %v1553
        %v1587 = vunpack.c.l.bf16 %v1555
        %v1588 = vunpack.c.h.bf16 %v1555
        %v1589 = vunpack.c.l.bf16 %v1556
        %v1590 = vunpack.c.h.bf16 %v1556
        %v1591 = vunpack.c.l.bf16 %v1557
        %v1592 = vunpack.c.h.bf16 %v1557
        %v1593 = vunpack.c.l.bf16 %v1558
        %v1594 = vunpack.c.h.bf16 %v1558
        %v1595 = vunpack.c.l.bf16 %v1559
        %v1596 = vunpack.c.h.bf16 %v1559
        %v1597 = vunpack.c.l.bf16 %v1560
        %v1598 = vunpack.c.h.bf16 %v1560
        %v1599 = vunpack.c.l.bf16 %v1561
        %v1600 = vunpack.c.h.bf16 %v1561
        %v1601 = vunpack.c.l.bf16 %v1562
        %v1602 = vunpack.c.h.bf16 %v1562
        %v1603 = vunpack.c.l.bf16 %v1563
        %v1604 = vunpack.c.h.bf16 %v1563
        %v1605 = vunpack.c.l.bf16 %v1564
        %v1606 = vunpack.c.h.bf16 %v1564
        %v1607 = vunpack.c.l.bf16 %v1565
        %v1608 = vunpack.c.h.bf16 %v1565
        %v1609 = vunpack.c.l.bf16 %v1566
        %v1610 = vunpack.c.h.bf16 %v1566
        %v1611 = vunpack.c.l.bf16 %v1567
        %v1612 = vunpack.c.h.bf16 %v1567
        %v1613 = vunpack.c.l.bf16 %v1568
        %v1614 = vunpack.c.h.bf16 %v1568
        %v1615 = vunpack.c.l.bf16 %v1569
        %v1616 = vunpack.c.h.bf16 %v1569
        %v1617 = vunpack.c.l.bf16 %v1570
        %v1618 = vunpack.c.h.bf16 %v1570
        %v1619 = vunpack.c.l.bf16 %v1571
        %v1620 = vunpack.c.h.bf16 %v1571
        %v1621 = vunpack.c.l.bf16 %v1572
        %v1622 = vunpack.c.h.bf16 %v1572
        %v1623 = vunpack.c.l.bf16 %v1573
        %v1624 = vunpack.c.h.bf16 %v1573
        %v1625 = vunpack.c.l.bf16 %v1574
        %v1626 = vunpack.c.h.bf16 %v1574
        %v1627 = vunpack.c.l.bf16 %v1575
        %v1628 = vunpack.c.h.bf16 %v1575
        %v1629 = vunpack.c.l.bf16 %v1576
        %v1630 = vunpack.c.h.bf16 %v1576
        %v1631 = vunpack.c.l.bf16 %v1577
        %v1632 = vunpack.c.h.bf16 %v1577
        %v1633 = vunpack.c.l.bf16 %v1578
        %v1634 = vunpack.c.h.bf16 %v1578
        %v1635 = vunpack.c.l.bf16 %v1579
        %v1636 = vunpack.c.h.bf16 %v1579
        %v1637 = vunpack.c.l.bf16 %v1580
        %v1638 = vunpack.c.h.bf16 %v1580
        %v1639 = vunpack.c.l.bf16 %v1581
        %v1640 = vunpack.c.h.bf16 %v1581
        %v1641 = vunpack.c.l.bf16 %v1582
        %v1642 = vunpack.c.h.bf16 %v1582
        %v1643 = vunpack.c.l.bf16 %v1583
        %v1644 = vunpack.c.h.bf16 %v1583
        %v1645 = vunpack.c.l.bf16 %v1584
        %v1646 = vunpack.c.h.bf16 %v1584
        %v1647 = vunpack.c.l.bf16 %v1585
        %v1648 = vunpack.c.h.bf16 %v1585
        %v1649 = vunpack.c.l.bf16 %v1586
        %v1650 = vunpack.c.h.bf16 %v1586
        %v1651 = vtanh.pop %v1587
        %v1652 = vtanh.pop %v1588
        %v1653 = vtanh.pop %v1589
        %v1654 = vtanh.pop %v1590
        %v1655 = vtanh.pop %v1591
        %v1656 = vtanh.pop %v1592
        %v1657 = vtanh.pop %v1593
        %v1658 = vtanh.pop %v1594
        %v1659 = vtanh.pop %v1595
        %v1660 = vtanh.pop %v1596
        %v1661 = vtanh.pop %v1597
        %v1662 = vtanh.pop %v1598
        %v1663 = vtanh.pop %v1599
        %v1664 = vtanh.pop %v1600
        %v1665 = vtanh.pop %v1601
        %v1666 = vtanh.pop %v1602
        %v1667 = vtanh.pop %v1603
        %v1668 = vtanh.pop %v1604
        %v1669 = vtanh.pop %v1605
        %v1670 = vtanh.pop %v1606
        %v1671 = vtanh.pop %v1607
        %v1672 = vtanh.pop %v1608
        %v1673 = vtanh.pop %v1609
        %v1674 = vtanh.pop %v1610
        %v1675 = vtanh.pop %v1611
        %v1676 = vtanh.pop %v1612
        %v1677 = vtanh.pop %v1613
        %v1678 = vtanh.pop %v1614
        %v1679 = vtanh.pop %v1615
        %v1680 = vtanh.pop %v1616
        %v1681 = vtanh.pop %v1617
        %v1682 = vtanh.pop %v1618
        %v1683 = vtanh.pop %v1619
        %v1684 = vtanh.pop %v1620
        %v1685 = vtanh.pop %v1621
        %v1686 = vtanh.pop %v1622
        %v1687 = vtanh.pop %v1623
        %v1688 = vtanh.pop %v1624
        %v1689 = vtanh.pop %v1625
        %v1690 = vtanh.pop %v1626
        %v1691 = vtanh.pop %v1627
        %v1692 = vtanh.pop %v1628
        %v1693 = vtanh.pop %v1629
        %v1694 = vtanh.pop %v1630
        %v1695 = vtanh.pop %v1631
        %v1696 = vtanh.pop %v1632
        %v1697 = vtanh.pop %v1633
        %v1698 = vtanh.pop %v1634
        %v1699 = vtanh.pop %v1635
        %v1700 = vtanh.pop %v1636
        %v1701 = vtanh.pop %v1637
        %v1702 = vtanh.pop %v1638
        %v1703 = vtanh.pop %v1639
        %v1704 = vtanh.pop %v1640
        %v1705 = vtanh.pop %v1641
        %v1706 = vtanh.pop %v1642
        %v1707 = vtanh.pop %v1643
        %v1708 = vtanh.pop %v1644
        %v1709 = vtanh.pop %v1645
        %v1710 = vtanh.pop %v1646
        %v1711 = vtanh.pop %v1647
        %v1712 = vtanh.pop %v1648
        %v1713 = vtanh.pop %v1649
        %v1714 = vtanh.pop %v1650
        %v1715 = vpack.c.bf16 %v1652, %v1651
        %v1716 = vpack.c.bf16 %v1654, %v1653
        %v1717 = vpack.c.bf16 %v1656, %v1655
        %v1718 = vpack.c.bf16 %v1658, %v1657
        %v1719 = vpack.c.bf16 %v1660, %v1659
        %v1720 = vpack.c.bf16 %v1662, %v1661
        %v1721 = vpack.c.bf16 %v1664, %v1663
        %v1722 = vpack.c.bf16 %v1666, %v1665
        %v1723 = vpack.c.bf16 %v1668, %v1667
        %v1724 = vpack.c.bf16 %v1670, %v1669
        %v1725 = vpack.c.bf16 %v1672, %v1671
        %v1726 = vpack.c.bf16 %v1674, %v1673
        %v1727 = vpack.c.bf16 %v1676, %v1675
        %v1728 = vpack.c.bf16 %v1678, %v1677
        %v1729 = vpack.c.bf16 %v1680, %v1679
        %v1730 = vpack.c.bf16 %v1682, %v1681
        %v1731 = vpack.c.bf16 %v1684, %v1683
        %v1732 = vpack.c.bf16 %v1686, %v1685
        %v1733 = vpack.c.bf16 %v1688, %v1687
        %v1734 = vpack.c.bf16 %v1690, %v1689
        %v1735 = vpack.c.bf16 %v1692, %v1691
        %v1736 = vpack.c.bf16 %v1694, %v1693
        %v1737 = vpack.c.bf16 %v1696, %v1695
        %v1738 = vpack.c.bf16 %v1698, %v1697
        %v1739 = vpack.c.bf16 %v1700, %v1699
        %v1740 = vpack.c.bf16 %v1702, %v1701
        %v1741 = vpack.c.bf16 %v1704, %v1703
        %v1742 = vpack.c.bf16 %v1706, %v1705
        %v1743 = vpack.c.bf16 %v1708, %v1707
        %v1744 = vpack.c.bf16 %v1710, %v1709
        %v1745 = vpack.c.bf16 %v1712, %v1711
        %v1746 = vpack.c.bf16 %v1714, %v1713
        %v1747 = vunpack.c.l.bf16 %v1715
        %v1748 = vunpack.c.h.bf16 %v1715
        %v1749 = vunpack.c.l.bf16 %v1716
        %v1750 = vunpack.c.h.bf16 %v1716
        %v1751 = vunpack.c.l.bf16 %v1717
        %v1752 = vunpack.c.h.bf16 %v1717
        %v1753 = vunpack.c.l.bf16 %v1718
        %v1754 = vunpack.c.h.bf16 %v1718
        %v1755 = vunpack.c.l.bf16 %v1719
        %v1756 = vunpack.c.h.bf16 %v1719
        %v1757 = vunpack.c.l.bf16 %v1720
        %v1758 = vunpack.c.h.bf16 %v1720
        %v1759 = vunpack.c.l.bf16 %v1721
        %v1760 = vunpack.c.h.bf16 %v1721
        %v1761 = vunpack.c.l.bf16 %v1722
        %v1762 = vunpack.c.h.bf16 %v1722
        %v1763 = vunpack.c.l.bf16 %v1723
        %v1764 = vunpack.c.h.bf16 %v1723
        %v1765 = vunpack.c.l.bf16 %v1724
        %v1766 = vunpack.c.h.bf16 %v1724
        %v1767 = vunpack.c.l.bf16 %v1725
        %v1768 = vunpack.c.h.bf16 %v1725
        %v1769 = vunpack.c.l.bf16 %v1726
        %v1770 = vunpack.c.h.bf16 %v1726
        %v1771 = vunpack.c.l.bf16 %v1727
        %v1772 = vunpack.c.h.bf16 %v1727
        %v1773 = vunpack.c.l.bf16 %v1728
        %v1774 = vunpack.c.h.bf16 %v1728
        %v1775 = vunpack.c.l.bf16 %v1729
        %v1776 = vunpack.c.h.bf16 %v1729
        %v1777 = vunpack.c.l.bf16 %v1730
        %v1778 = vunpack.c.h.bf16 %v1730
        %v1779 = vunpack.c.l.bf16 %v1731
        %v1780 = vunpack.c.h.bf16 %v1731
        %v1781 = vunpack.c.l.bf16 %v1732
        %v1782 = vunpack.c.h.bf16 %v1732
        %v1783 = vunpack.c.l.bf16 %v1733
        %v1784 = vunpack.c.h.bf16 %v1733
        %v1785 = vunpack.c.l.bf16 %v1734
        %v1786 = vunpack.c.h.bf16 %v1734
        %v1787 = vunpack.c.l.bf16 %v1735
        %v1788 = vunpack.c.h.bf16 %v1735
        %v1789 = vunpack.c.l.bf16 %v1736
        %v1790 = vunpack.c.h.bf16 %v1736
        %v1791 = vunpack.c.l.bf16 %v1737
        %v1792 = vunpack.c.h.bf16 %v1737
        %v1793 = vunpack.c.l.bf16 %v1738
        %v1794 = vunpack.c.h.bf16 %v1738
        %v1795 = vunpack.c.l.bf16 %v1739
        %v1796 = vunpack.c.h.bf16 %v1739
        %v1797 = vunpack.c.l.bf16 %v1740
        %v1798 = vunpack.c.h.bf16 %v1740
        %v1799 = vunpack.c.l.bf16 %v1741
        %v1800 = vunpack.c.h.bf16 %v1741
        %v1801 = vunpack.c.l.bf16 %v1742
        %v1802 = vunpack.c.h.bf16 %v1742
        %v1803 = vunpack.c.l.bf16 %v1743
        %v1804 = vunpack.c.h.bf16 %v1743
        %v1805 = vunpack.c.l.bf16 %v1744
        %v1806 = vunpack.c.h.bf16 %v1744
        %v1807 = vunpack.c.l.bf16 %v1745
        %v1808 = vunpack.c.h.bf16 %v1745
        %v1809 = vunpack.c.l.bf16 %v1746
        %v1810 = vunpack.c.h.bf16 %v1746
        %v1811 = vadd.f32 %v1747, 1.0
        %v1812 = vadd.f32 %v1748, 1.0
        %v1813 = vadd.f32 %v1749, 1.0
        %v1814 = vadd.f32 %v1750, 1.0
        %v1815 = vadd.f32 %v1751, 1.0
        %v1816 = vadd.f32 %v1752, 1.0
        %v1817 = vadd.f32 %v1753, 1.0
        %v1818 = vadd.f32 %v1754, 1.0
        %v1819 = vadd.f32 %v1755, 1.0
        %v1820 = vadd.f32 %v1756, 1.0
        %v1821 = vadd.f32 %v1757, 1.0
        %v1822 = vadd.f32 %v1758, 1.0
        %v1823 = vadd.f32 %v1759, 1.0
        %v1824 = vadd.f32 %v1760, 1.0
        %v1825 = vadd.f32 %v1761, 1.0
        %v1826 = vadd.f32 %v1762, 1.0
        %v1827 = vadd.f32 %v1763, 1.0
        %v1828 = vadd.f32 %v1764, 1.0
        %v1829 = vadd.f32 %v1765, 1.0
        %v1830 = vadd.f32 %v1766, 1.0
        %v1831 = vadd.f32 %v1767, 1.0
        %v1832 = vadd.f32 %v1768, 1.0
        %v1833 = vadd.f32 %v1769, 1.0
        %v1834 = vadd.f32 %v1770, 1.0
        %v1835 = vadd.f32 %v1771, 1.0
        %v1836 = vadd.f32 %v1772, 1.0
        %v1837 = vadd.f32 %v1773, 1.0
        %v1838 = vadd.f32 %v1774, 1.0
        %v1839 = vadd.f32 %v1775, 1.0
        %v1840 = vadd.f32 %v1776, 1.0
        %v1841 = vadd.f32 %v1777, 1.0
        %v1842 = vadd.f32 %v1778, 1.0
        %v1843 = vadd.f32 %v1779, 1.0
        %v1844 = vadd.f32 %v1780, 1.0
        %v1845 = vadd.f32 %v1781, 1.0
        %v1846 = vadd.f32 %v1782, 1.0
        %v1847 = vadd.f32 %v1783, 1.0
        %v1848 = vadd.f32 %v1784, 1.0
        %v1849 = vadd.f32 %v1785, 1.0
        %v1850 = vadd.f32 %v1786, 1.0
        %v1851 = vadd.f32 %v1787, 1.0
        %v1852 = vadd.f32 %v1788, 1.0
        %v1853 = vadd.f32 %v1789, 1.0
        %v1854 = vadd.f32 %v1790, 1.0
        %v1855 = vadd.f32 %v1791, 1.0
        %v1856 = vadd.f32 %v1792, 1.0
        %v1857 = vadd.f32 %v1793, 1.0
        %v1858 = vadd.f32 %v1794, 1.0
        %v1859 = vadd.f32 %v1795, 1.0
        %v1860 = vadd.f32 %v1796, 1.0
        %v1861 = vadd.f32 %v1797, 1.0
        %v1862 = vadd.f32 %v1798, 1.0
        %v1863 = vadd.f32 %v1799, 1.0
        %v1864 = vadd.f32 %v1800, 1.0
        %v1865 = vadd.f32 %v1801, 1.0
        %v1866 = vadd.f32 %v1802, 1.0
        %v1867 = vadd.f32 %v1803, 1.0
        %v1868 = vadd.f32 %v1804, 1.0
        %v1869 = vadd.f32 %v1805, 1.0
        %v1870 = vadd.f32 %v1806, 1.0
        %v1871 = vadd.f32 %v1807, 1.0
        %v1872 = vadd.f32 %v1808, 1.0
        %v1873 = vadd.f32 %v1809, 1.0
        %v1874 = vadd.f32 %v1810, 1.0
        %v1875 = vpack.c.bf16 %v1812, %v1811
        %v1876 = vpack.c.bf16 %v1814, %v1813
        %v1877 = vpack.c.bf16 %v1816, %v1815
        %v1878 = vpack.c.bf16 %v1818, %v1817
        %v1879 = vpack.c.bf16 %v1820, %v1819
        %v1880 = vpack.c.bf16 %v1822, %v1821
        %v1881 = vpack.c.bf16 %v1824, %v1823
        %v1882 = vpack.c.bf16 %v1826, %v1825
        %v1883 = vpack.c.bf16 %v1828, %v1827
        %v1884 = vpack.c.bf16 %v1830, %v1829
        %v1885 = vpack.c.bf16 %v1832, %v1831
        %v1886 = vpack.c.bf16 %v1834, %v1833
        %v1887 = vpack.c.bf16 %v1836, %v1835
        %v1888 = vpack.c.bf16 %v1838, %v1837
        %v1889 = vpack.c.bf16 %v1840, %v1839
        %v1890 = vpack.c.bf16 %v1842, %v1841
        %v1891 = vpack.c.bf16 %v1844, %v1843
        %v1892 = vpack.c.bf16 %v1846, %v1845
        %v1893 = vpack.c.bf16 %v1848, %v1847
        %v1894 = vpack.c.bf16 %v1850, %v1849
        %v1895 = vpack.c.bf16 %v1852, %v1851
        %v1896 = vpack.c.bf16 %v1854, %v1853
        %v1897 = vpack.c.bf16 %v1856, %v1855
        %v1898 = vpack.c.bf16 %v1858, %v1857
        %v1899 = vpack.c.bf16 %v1860, %v1859
        %v1900 = vpack.c.bf16 %v1862, %v1861
        %v1901 = vpack.c.bf16 %v1864, %v1863
        %v1902 = vpack.c.bf16 %v1866, %v1865
        %v1903 = vpack.c.bf16 %v1868, %v1867
        %v1904 = vpack.c.bf16 %v1870, %v1869
        %v1905 = vpack.c.bf16 %v1872, %v1871
        %v1906 = vpack.c.bf16 %v1874, %v1873
        %v1907 = vunpack.c.l.bf16 %v1875
        %v1908 = vunpack.c.h.bf16 %v1875
        %v1909 = vunpack.c.l.bf16 %v1876
        %v1910 = vunpack.c.h.bf16 %v1876
        %v1911 = vunpack.c.l.bf16 %v1877
        %v1912 = vunpack.c.h.bf16 %v1877
        %v1913 = vunpack.c.l.bf16 %v1878
        %v1914 = vunpack.c.h.bf16 %v1878
        %v1915 = vunpack.c.l.bf16 %v1879
        %v1916 = vunpack.c.h.bf16 %v1879
        %v1917 = vunpack.c.l.bf16 %v1880
        %v1918 = vunpack.c.h.bf16 %v1880
        %v1919 = vunpack.c.l.bf16 %v1881
        %v1920 = vunpack.c.h.bf16 %v1881
        %v1921 = vunpack.c.l.bf16 %v1882
        %v1922 = vunpack.c.h.bf16 %v1882
        %v1923 = vunpack.c.l.bf16 %v1883
        %v1924 = vunpack.c.h.bf16 %v1883
        %v1925 = vunpack.c.l.bf16 %v1884
        %v1926 = vunpack.c.h.bf16 %v1884
        %v1927 = vunpack.c.l.bf16 %v1885
        %v1928 = vunpack.c.h.bf16 %v1885
        %v1929 = vunpack.c.l.bf16 %v1886
        %v1930 = vunpack.c.h.bf16 %v1886
        %v1931 = vunpack.c.l.bf16 %v1887
        %v1932 = vunpack.c.h.bf16 %v1887
        %v1933 = vunpack.c.l.bf16 %v1888
        %v1934 = vunpack.c.h.bf16 %v1888
        %v1935 = vunpack.c.l.bf16 %v1889
        %v1936 = vunpack.c.h.bf16 %v1889
        %v1937 = vunpack.c.l.bf16 %v1890
        %v1938 = vunpack.c.h.bf16 %v1890
        %v1939 = vunpack.c.l.bf16 %v1891
        %v1940 = vunpack.c.h.bf16 %v1891
        %v1941 = vunpack.c.l.bf16 %v1892
        %v1942 = vunpack.c.h.bf16 %v1892
        %v1943 = vunpack.c.l.bf16 %v1893
        %v1944 = vunpack.c.h.bf16 %v1893
        %v1945 = vunpack.c.l.bf16 %v1894
        %v1946 = vunpack.c.h.bf16 %v1894
        %v1947 = vunpack.c.l.bf16 %v1895
        %v1948 = vunpack.c.h.bf16 %v1895
        %v1949 = vunpack.c.l.bf16 %v1896
        %v1950 = vunpack.c.h.bf16 %v1896
        %v1951 = vunpack.c.l.bf16 %v1897
        %v1952 = vunpack.c.h.bf16 %v1897
        %v1953 = vunpack.c.l.bf16 %v1898
        %v1954 = vunpack.c.h.bf16 %v1898
        %v1955 = vunpack.c.l.bf16 %v1899
        %v1956 = vunpack.c.h.bf16 %v1899
        %v1957 = vunpack.c.l.bf16 %v1900
        %v1958 = vunpack.c.h.bf16 %v1900
        %v1959 = vunpack.c.l.bf16 %v1901
        %v1960 = vunpack.c.h.bf16 %v1901
        %v1961 = vunpack.c.l.bf16 %v1902
        %v1962 = vunpack.c.h.bf16 %v1902
        %v1963 = vunpack.c.l.bf16 %v1903
        %v1964 = vunpack.c.h.bf16 %v1903
        %v1965 = vunpack.c.l.bf16 %v1904
        %v1966 = vunpack.c.h.bf16 %v1904
        %v1967 = vunpack.c.l.bf16 %v1905
        %v1968 = vunpack.c.h.bf16 %v1905
        %v1969 = vunpack.c.l.bf16 %v1906
        %v1970 = vunpack.c.h.bf16 %v1906
        %v1971 = vmul.f32 %v1907, 0.5
        %v1972 = vmul.f32 %v1908, 0.5
        %v1973 = vmul.f32 %v1909, 0.5
        %v1974 = vmul.f32 %v1910, 0.5
        %v1975 = vmul.f32 %v1911, 0.5
        %v1976 = vmul.f32 %v1912, 0.5
        %v1977 = vmul.f32 %v1913, 0.5
        %v1978 = vmul.f32 %v1914, 0.5
        %v1979 = vmul.f32 %v1915, 0.5
        %v1980 = vmul.f32 %v1916, 0.5
        %v1981 = vmul.f32 %v1917, 0.5
        %v1982 = vmul.f32 %v1918, 0.5
        %v1983 = vmul.f32 %v1919, 0.5
        %v1984 = vmul.f32 %v1920, 0.5
        %v1985 = vmul.f32 %v1921, 0.5
        %v1986 = vmul.f32 %v1922, 0.5
        %v1987 = vmul.f32 %v1923, 0.5
        %v1988 = vmul.f32 %v1924, 0.5
        %v1989 = vmul.f32 %v1925, 0.5
        %v1990 = vmul.f32 %v1926, 0.5
        %v1991 = vmul.f32 %v1927, 0.5
        %v1992 = vmul.f32 %v1928, 0.5
        %v1993 = vmul.f32 %v1929, 0.5
        %v1994 = vmul.f32 %v1930, 0.5
        %v1995 = vmul.f32 %v1931, 0.5
        %v1996 = vmul.f32 %v1932, 0.5
        %v1997 = vmul.f32 %v1933, 0.5
        %v1998 = vmul.f32 %v1934, 0.5
        %v1999 = vmul.f32 %v1935, 0.5
        %v2000 = vmul.f32 %v1936, 0.5
        %v2001 = vmul.f32 %v1937, 0.5
        %v2002 = vmul.f32 %v1938, 0.5
        %v2003 = vmul.f32 %v1939, 0.5
        %v2004 = vmul.f32 %v1940, 0.5
        %v2005 = vmul.f32 %v1941, 0.5
        %v2006 = vmul.f32 %v1942, 0.5
        %v2007 = vmul.f32 %v1943, 0.5
        %v2008 = vmul.f32 %v1944, 0.5
        %v2009 = vmul.f32 %v1945, 0.5
        %v2010 = vmul.f32 %v1946, 0.5
        %v2011 = vmul.f32 %v1947, 0.5
        %v2012 = vmul.f32 %v1948, 0.5
        %v2013 = vmul.f32 %v1949, 0.5
        %v2014 = vmul.f32 %v1950, 0.5
        %v2015 = vmul.f32 %v1951, 0.5
        %v2016 = vmul.f32 %v1952, 0.5
        %v2017 = vmul.f32 %v1953, 0.5
        %v2018 = vmul.f32 %v1954, 0.5
        %v2019 = vmul.f32 %v1955, 0.5
        %v2020 = vmul.f32 %v1956, 0.5
        %v2021 = vmul.f32 %v1957, 0.5
        %v2022 = vmul.f32 %v1958, 0.5
        %v2023 = vmul.f32 %v1959, 0.5
        %v2024 = vmul.f32 %v1960, 0.5
        %v2025 = vmul.f32 %v1961, 0.5
        %v2026 = vmul.f32 %v1962, 0.5
        %v2027 = vmul.f32 %v1963, 0.5
        %v2028 = vmul.f32 %v1964, 0.5
        %v2029 = vmul.f32 %v1965, 0.5
        %v2030 = vmul.f32 %v1966, 0.5
        %v2031 = vmul.f32 %v1967, 0.5
        %v2032 = vmul.f32 %v1968, 0.5
        %v2033 = vmul.f32 %v1969, 0.5
        %v2034 = vmul.f32 %v1970, 0.5
        %v2035 = vpack.c.bf16 %v1972, %v1971
        %v2036 = vpack.c.bf16 %v1974, %v1973
        %v2037 = vpack.c.bf16 %v1976, %v1975
        %v2038 = vpack.c.bf16 %v1978, %v1977
        %v2039 = vpack.c.bf16 %v1980, %v1979
        %v2040 = vpack.c.bf16 %v1982, %v1981
        %v2041 = vpack.c.bf16 %v1984, %v1983
        %v2042 = vpack.c.bf16 %v1986, %v1985
        %v2043 = vpack.c.bf16 %v1988, %v1987
        %v2044 = vpack.c.bf16 %v1990, %v1989
        %v2045 = vpack.c.bf16 %v1992, %v1991
        %v2046 = vpack.c.bf16 %v1994, %v1993
        %v2047 = vpack.c.bf16 %v1996, %v1995
        %v2048 = vpack.c.bf16 %v1998, %v1997
        %v2049 = vpack.c.bf16 %v2000, %v1999
        %v2050 = vpack.c.bf16 %v2002, %v2001
        %v2051 = vpack.c.bf16 %v2004, %v2003
        %v2052 = vpack.c.bf16 %v2006, %v2005
        %v2053 = vpack.c.bf16 %v2008, %v2007
        %v2054 = vpack.c.bf16 %v2010, %v2009
        %v2055 = vpack.c.bf16 %v2012, %v2011
        %v2056 = vpack.c.bf16 %v2014, %v2013
        %v2057 = vpack.c.bf16 %v2016, %v2015
        %v2058 = vpack.c.bf16 %v2018, %v2017
        %v2059 = vpack.c.bf16 %v2020, %v2019
        %v2060 = vpack.c.bf16 %v2022, %v2021
        %v2061 = vpack.c.bf16 %v2024, %v2023
        %v2062 = vpack.c.bf16 %v2026, %v2025
        %v2063 = vpack.c.bf16 %v2028, %v2027
        %v2064 = vpack.c.bf16 %v2030, %v2029
        %v2065 = vpack.c.bf16 %v2032, %v2031
        %v2066 = vpack.c.bf16 %v2034, %v2033
        %v2067 = vunpack.c.l.bf16 %v2035
        %v2068 = vunpack.c.h.bf16 %v2035
        %v2069 = vunpack.c.l.bf16 %v2036
        %v2070 = vunpack.c.h.bf16 %v2036
        %v2071 = vunpack.c.l.bf16 %v2037
        %v2072 = vunpack.c.h.bf16 %v2037
        %v2073 = vunpack.c.l.bf16 %v2038
        %v2074 = vunpack.c.h.bf16 %v2038
        %v2075 = vunpack.c.l.bf16 %v2039
        %v2076 = vunpack.c.h.bf16 %v2039
        %v2077 = vunpack.c.l.bf16 %v2040
        %v2078 = vunpack.c.h.bf16 %v2040
        %v2079 = vunpack.c.l.bf16 %v2041
        %v2080 = vunpack.c.h.bf16 %v2041
        %v2081 = vunpack.c.l.bf16 %v2042
        %v2082 = vunpack.c.h.bf16 %v2042
        %v2083 = vunpack.c.l.bf16 %v2043
        %v2084 = vunpack.c.h.bf16 %v2043
        %v2085 = vunpack.c.l.bf16 %v2044
        %v2086 = vunpack.c.h.bf16 %v2044
        %v2087 = vunpack.c.l.bf16 %v2045
        %v2088 = vunpack.c.h.bf16 %v2045
        %v2089 = vunpack.c.l.bf16 %v2046
        %v2090 = vunpack.c.h.bf16 %v2046
        %v2091 = vunpack.c.l.bf16 %v2047
        %v2092 = vunpack.c.h.bf16 %v2047
        %v2093 = vunpack.c.l.bf16 %v2048
        %v2094 = vunpack.c.h.bf16 %v2048
        %v2095 = vunpack.c.l.bf16 %v2049
        %v2096 = vunpack.c.h.bf16 %v2049
        %v2097 = vunpack.c.l.bf16 %v2050
        %v2098 = vunpack.c.h.bf16 %v2050
        %v2099 = vunpack.c.l.bf16 %v2051
        %v2100 = vunpack.c.h.bf16 %v2051
        %v2101 = vunpack.c.l.bf16 %v2052
        %v2102 = vunpack.c.h.bf16 %v2052
        %v2103 = vunpack.c.l.bf16 %v2053
        %v2104 = vunpack.c.h.bf16 %v2053
        %v2105 = vunpack.c.l.bf16 %v2054
        %v2106 = vunpack.c.h.bf16 %v2054
        %v2107 = vunpack.c.l.bf16 %v2055
        %v2108 = vunpack.c.h.bf16 %v2055
        %v2109 = vunpack.c.l.bf16 %v2056
        %v2110 = vunpack.c.h.bf16 %v2056
        %v2111 = vunpack.c.l.bf16 %v2057
        %v2112 = vunpack.c.h.bf16 %v2057
        %v2113 = vunpack.c.l.bf16 %v2058
        %v2114 = vunpack.c.h.bf16 %v2058
        %v2115 = vunpack.c.l.bf16 %v2059
        %v2116 = vunpack.c.h.bf16 %v2059
        %v2117 = vunpack.c.l.bf16 %v2060
        %v2118 = vunpack.c.h.bf16 %v2060
        %v2119 = vunpack.c.l.bf16 %v2061
        %v2120 = vunpack.c.h.bf16 %v2061
        %v2121 = vunpack.c.l.bf16 %v2062
        %v2122 = vunpack.c.h.bf16 %v2062
        %v2123 = vunpack.c.l.bf16 %v2063
        %v2124 = vunpack.c.h.bf16 %v2063
        %v2125 = vunpack.c.l.bf16 %v2064
        %v2126 = vunpack.c.h.bf16 %v2064
        %v2127 = vunpack.c.l.bf16 %v2065
        %v2128 = vunpack.c.h.bf16 %v2065
        %v2129 = vunpack.c.l.bf16 %v2066
        %v2130 = vunpack.c.h.bf16 %v2066
        %v2131 = vmul.f32 %v787, %v2067
        %v2132 = vmul.f32 %v788, %v2068
        %v2133 = vmul.f32 %v789, %v2069
        %v2134 = vmul.f32 %v790, %v2070
        %v2135 = vmul.f32 %v791, %v2071
        %v2136 = vmul.f32 %v792, %v2072
        %v2137 = vmul.f32 %v793, %v2073
        %v2138 = vmul.f32 %v794, %v2074
        %v2139 = vmul.f32 %v795, %v2075
        %v2140 = vmul.f32 %v796, %v2076
        %v2141 = vmul.f32 %v797, %v2077
        %v2142 = vmul.f32 %v798, %v2078
        %v2143 = vmul.f32 %v799, %v2079
        %v2144 = vmul.f32 %v800, %v2080
        %v2145 = vmul.f32 %v801, %v2081
        %v2146 = vmul.f32 %v802, %v2082
        %v2147 = vmul.f32 %v803, %v2083
        %v2148 = vmul.f32 %v804, %v2084
        %v2149 = vmul.f32 %v805, %v2085
        %v2150 = vmul.f32 %v806, %v2086
        %v2151 = vmul.f32 %v807, %v2087
        %v2152 = vmul.f32 %v808, %v2088
        %v2153 = vmul.f32 %v809, %v2089
        %v2154 = vmul.f32 %v810, %v2090
        %v2155 = vmul.f32 %v811, %v2091
        %v2156 = vmul.f32 %v812, %v2092
        %v2157 = vmul.f32 %v813, %v2093
        %v2158 = vmul.f32 %v814, %v2094
        %v2159 = vmul.f32 %v815, %v2095
        %v2160 = vmul.f32 %v816, %v2096
        %v2161 = vmul.f32 %v817, %v2097
        %v2162 = vmul.f32 %v818, %v2098
        %v2163 = vmul.f32 %v819, %v2099
        %v2164 = vmul.f32 %v820, %v2100
        %v2165 = vmul.f32 %v821, %v2101
        %v2166 = vmul.f32 %v822, %v2102
        %v2167 = vmul.f32 %v823, %v2103
        %v2168 = vmul.f32 %v824, %v2104
        %v2169 = vmul.f32 %v825, %v2105
        %v2170 = vmul.f32 %v826, %v2106
        %v2171 = vmul.f32 %v827, %v2107
        %v2172 = vmul.f32 %v828, %v2108
        %v2173 = vmul.f32 %v829, %v2109
        %v2174 = vmul.f32 %v830, %v2110
        %v2175 = vmul.f32 %v831, %v2111
        %v2176 = vmul.f32 %v832, %v2112
        %v2177 = vmul.f32 %v833, %v2113
        %v2178 = vmul.f32 %v834, %v2114
        %v2179 = vmul.f32 %v835, %v2115
        %v2180 = vmul.f32 %v836, %v2116
        %v2181 = vmul.f32 %v837, %v2117
        %v2182 = vmul.f32 %v838, %v2118
        %v2183 = vmul.f32 %v839, %v2119
        %v2184 = vmul.f32 %v840, %v2120
        %v2185 = vmul.f32 %v841, %v2121
        %v2186 = vmul.f32 %v842, %v2122
        %v2187 = vmul.f32 %v843, %v2123
        %v2188 = vmul.f32 %v844, %v2124
        %v2189 = vmul.f32 %v845, %v2125
        %v2190 = vmul.f32 %v846, %v2126
        %v2191 = vmul.f32 %v847, %v2127
        %v2192 = vmul.f32 %v848, %v2128
        %v2193 = vmul.f32 %v849, %v2129
        %v2194 = vmul.f32 %v850, %v2130
        %v2195 = vpack.c.bf16 %v2135, %v2131
        %v2196 = vpack.c.bf16 %v2136, %v2132
        %v2197 = vpack.c.bf16 %v2137, %v2133
        %v2198 = vpack.c.bf16 %v2138, %v2134
        %v2199 = vpack.c.bf16 %v2143, %v2139
        %v2200 = vpack.c.bf16 %v2144, %v2140
        %v2201 = vpack.c.bf16 %v2145, %v2141
        %v2202 = vpack.c.bf16 %v2146, %v2142
        %v2203 = vpack.c.bf16 %v2151, %v2147
        %v2204 = vpack.c.bf16 %v2152, %v2148
        %v2205 = vpack.c.bf16 %v2153, %v2149
        %v2206 = vpack.c.bf16 %v2154, %v2150
        %v2207 = vpack.c.bf16 %v2159, %v2155
        %v2208 = vpack.c.bf16 %v2160, %v2156
        %v2209 = vpack.c.bf16 %v2161, %v2157
        %v2210 = vpack.c.bf16 %v2162, %v2158
        %v2211 = vpack.c.bf16 %v2167, %v2163
        %v2212 = vpack.c.bf16 %v2168, %v2164
        %v2213 = vpack.c.bf16 %v2169, %v2165
        %v2214 = vpack.c.bf16 %v2170, %v2166
        %v2215 = vpack.c.bf16 %v2175, %v2171
        %v2216 = vpack.c.bf16 %v2176, %v2172
        %v2217 = vpack.c.bf16 %v2177, %v2173
        %v2218 = vpack.c.bf16 %v2178, %v2174
        %v2219 = vpack.c.bf16 %v2183, %v2179
        %v2220 = vpack.c.bf16 %v2184, %v2180
        %v2221 = vpack.c.bf16 %v2185, %v2181
        %v2222 = vpack.c.bf16 %v2186, %v2182
        %v2223 = vpack.c.bf16 %v2191, %v2187
        %v2224 = vpack.c.bf16 %v2192, %v2188
        %v2225 = vpack.c.bf16 %v2193, %v2189
        %v2226 = vpack.c.bf16 %v2194, %v2190
        %v2227 = vld [vmem:[%s3] sm:$0xf]
        %v2228 = vld [vmem:[%s3 + $0x4] sm:$0xf]
        %v2229 = vld [vmem:[%s3 + $0x8] sm:$0xf]
        %v2230 = vld [vmem:[%s3 + $0xc] sm:$0xf]
        %v2231 = vld [vmem:[%s3 + $0x10] sm:$0xf]
        %v2232 = vld [vmem:[%s3 + $0x14] sm:$0xf]
        %v2233 = vld [vmem:[%s3 + $0x18] sm:$0xf]
        %v2234 = vld [vmem:[%s3 + $0x1c] sm:$0xf]
        %v2235 = vld [vmem:[%s3 + $0x20] sm:$0xf]
        %v2236 = vld [vmem:[%s3 + $0x24] sm:$0xf]
        %v2237 = vld [vmem:[%s3 + $0x28] sm:$0xf]
        %v2238 = vld [vmem:[%s3 + $0x2c] sm:$0xf]
        %v2239 = vld [vmem:[%s3 + $0x30] sm:$0xf]
        %v2240 = vld [vmem:[%s3 + $0x34] sm:$0xf]
        %v2241 = vld [vmem:[%s3 + $0x38] sm:$0xf]
        %v2242 = vld [vmem:[%s3 + $0x3c] sm:$0xf]
        %v2243 = vld [vmem:[%s3 + $0x40] sm:$0xf]
        %v2244 = vld [vmem:[%s3 + $0x44] sm:$0xf]
        %v2245 = vld [vmem:[%s3 + $0x48] sm:$0xf]
        %v2246 = vld [vmem:[%s3 + $0x4c] sm:$0xf]
        %v2247 = vld [vmem:[%s3 + $0x50] sm:$0xf]
        %v2248 = vld [vmem:[%s3 + $0x54] sm:$0xf]
        %v2249 = vld [vmem:[%s3 + $0x58] sm:$0xf]
        %v2250 = vld [vmem:[%s3 + $0x5c] sm:$0xf]
        %v2251 = vld [vmem:[%s3 + $0x60] sm:$0xf]
        %v2252 = vld [vmem:[%s3 + $0x64] sm:$0xf]
        %v2253 = vld [vmem:[%s3 + $0x68] sm:$0xf]
        %v2254 = vld [vmem:[%s3 + $0x6c] sm:$0xf]
        %v2255 = vld [vmem:[%s3 + $0x70] sm:$0xf]
        %v2256 = vld [vmem:[%s3 + $0x74] sm:$0xf]
        %v2257 = vld [vmem:[%s3 + $0x78] sm:$0xf]
        %v2258 = vld [vmem:[%s3 + $0x7c] sm:$0xf]
        %v2259 = vld [vmem:[%s3 + $0x80] sm:$0xf]
        %v2260 = vld [vmem:[%s3 + $0x84] sm:$0xf]
        %v2261 = vld [vmem:[%s3 + $0x88] sm:$0xf]
        %v2262 = vld [vmem:[%s3 + $0x8c] sm:$0xf]
        %v2263 = vld [vmem:[%s3 + $0x90] sm:$0xf]
        %v2264 = vld [vmem:[%s3 + $0x94] sm:$0xf]
        %v2265 = vld [vmem:[%s3 + $0x98] sm:$0xf]
        %v2266 = vld [vmem:[%s3 + $0x9c] sm:$0xf]
        %v2267 = vld [vmem:[%s3 + $0xa0] sm:$0xf]
        %v2268 = vld [vmem:[%s3 + $0xa4] sm:$0xf]
        %v2269 = vld [vmem:[%s3 + $0xa8] sm:$0xf]
        %v2270 = vld [vmem:[%s3 + $0xac] sm:$0xf]
        %v2271 = vld [vmem:[%s3 + $0xb0] sm:$0xf]
        %v2272 = vld [vmem:[%s3 + $0xb4] sm:$0xf]
        %v2273 = vld [vmem:[%s3 + $0xb8] sm:$0xf]
        %v2274 = vld [vmem:[%s3 + $0xbc] sm:$0xf]
        %v2275 = vld [vmem:[%s3 + $0xc0] sm:$0xf]
        %v2276 = vld [vmem:[%s3 + $0xc4] sm:$0xf]
        %v2277 = vld [vmem:[%s3 + $0xc8] sm:$0xf]
        %v2278 = vld [vmem:[%s3 + $0xcc] sm:$0xf]
        %v2279 = vld [vmem:[%s3 + $0xd0] sm:$0xf]
        %v2280 = vld [vmem:[%s3 + $0xd4] sm:$0xf]
        %v2281 = vld [vmem:[%s3 + $0xd8] sm:$0xf]
        %v2282 = vld [vmem:[%s3 + $0xdc] sm:$0xf]
        %v2283 = vld [vmem:[%s3 + $0xe0] sm:$0xf]
        %v2284 = vld [vmem:[%s3 + $0xe4] sm:$0xf]
        %v2285 = vld [vmem:[%s3 + $0xe8] sm:$0xf]
        %v2286 = vld [vmem:[%s3 + $0xec] sm:$0xf]
        %v2287 = vld [vmem:[%s3 + $0xf0] sm:$0xf]
        %v2288 = vld [vmem:[%s3 + $0xf4] sm:$0xf]
        %v2289 = vld [vmem:[%s3 + $0xf8] sm:$0xf]
        %v2290 = vld [vmem:[%s3 + $0xfc] sm:$0xf]
        %v2355 = vunpack.c.l.b16 %v2227
        %v2356 = vunpack.c.l.b16 %v2228
        %v2357 = vunpack.c.l.b16 %v2229
        %v2358 = vunpack.c.l.b16 %v2230
        %v2359 = vunpack.c.l.b16 %v2231
        %v2360 = vunpack.c.l.b16 %v2232
        %v2361 = vunpack.c.l.b16 %v2233
        %v2362 = vunpack.c.l.b16 %v2234
        %v2363 = vunpack.c.l.b16 %v2235
        %v2364 = vunpack.c.l.b16 %v2236
        %v2365 = vunpack.c.l.b16 %v2237
        %v2366 = vunpack.c.l.b16 %v2238
        %v2367 = vunpack.c.l.b16 %v2239
        %v2368 = vunpack.c.l.b16 %v2240
        %v2369 = vunpack.c.l.b16 %v2241
        %v2370 = vunpack.c.l.b16 %v2242
        %v2371 = vunpack.c.l.b16 %v2243
        %v2372 = vunpack.c.l.b16 %v2244
        %v2373 = vunpack.c.l.b16 %v2245
        %v2374 = vunpack.c.l.b16 %v2246
        %v2375 = vunpack.c.l.b16 %v2247
        %v2376 = vunpack.c.l.b16 %v2248
        %v2377 = vunpack.c.l.b16 %v2249
        %v2378 = vunpack.c.l.b16 %v2250
        %v2379 = vunpack.c.l.b16 %v2251
        %v2380 = vunpack.c.l.b16 %v2252
        %v2381 = vunpack.c.l.b16 %v2253
        %v2382 = vunpack.c.l.b16 %v2254
        %v2383 = vunpack.c.l.b16 %v2255
        %v2384 = vunpack.c.l.b16 %v2256
        %v2385 = vunpack.c.l.b16 %v2257
        %v2386 = vunpack.c.l.b16 %v2258
        %v2387 = vunpack.c.l.b16 %v2259
        %v2388 = vunpack.c.l.b16 %v2260
        %v2389 = vunpack.c.l.b16 %v2261
        %v2390 = vunpack.c.l.b16 %v2262
        %v2391 = vunpack.c.l.b16 %v2263
        %v2392 = vunpack.c.l.b16 %v2264
        %v2393 = vunpack.c.l.b16 %v2265
        %v2394 = vunpack.c.l.b16 %v2266
        %v2395 = vunpack.c.l.b16 %v2267
        %v2396 = vunpack.c.l.b16 %v2268
        %v2397 = vunpack.c.l.b16 %v2269
        %v2398 = vunpack.c.l.b16 %v2270
        %v2399 = vunpack.c.l.b16 %v2271
        %v2400 = vunpack.c.l.b16 %v2272
        %v2401 = vunpack.c.l.b16 %v2273
        %v2402 = vunpack.c.l.b16 %v2274
        %v2403 = vunpack.c.l.b16 %v2275
        %v2404 = vunpack.c.l.b16 %v2276
        %v2405 = vunpack.c.l.b16 %v2277
        %v2406 = vunpack.c.l.b16 %v2278
        %v2407 = vunpack.c.l.b16 %v2279
        %v2408 = vunpack.c.l.b16 %v2280
        %v2409 = vunpack.c.l.b16 %v2281
        %v2410 = vunpack.c.l.b16 %v2282
        %v2411 = vunpack.c.l.b16 %v2283
        %v2412 = vunpack.c.l.b16 %v2284
        %v2413 = vunpack.c.l.b16 %v2285
        %v2414 = vunpack.c.l.b16 %v2286
        %v2415 = vunpack.c.l.b16 %v2287
        %v2416 = vunpack.c.l.b16 %v2288
        %v2417 = vunpack.c.l.b16 %v2289
        %v2418 = vunpack.c.l.b16 %v2290
        %v2419 = vpack.c.b16 %v2356, %v2355
        %v2420 = vpack.c.b16 %v2358, %v2357
        %v2421 = vpack.c.b16 %v2360, %v2359
        %v2422 = vpack.c.b16 %v2362, %v2361
        %v2423 = vpack.c.b16 %v2364, %v2363
        %v2424 = vpack.c.b16 %v2366, %v2365
        %v2425 = vpack.c.b16 %v2368, %v2367
        %v2426 = vpack.c.b16 %v2370, %v2369
        %v2427 = vpack.c.b16 %v2372, %v2371
        %v2428 = vpack.c.b16 %v2374, %v2373
        %v2429 = vpack.c.b16 %v2376, %v2375
        %v2430 = vpack.c.b16 %v2378, %v2377
        %v2431 = vpack.c.b16 %v2380, %v2379
        %v2432 = vpack.c.b16 %v2382, %v2381
        %v2433 = vpack.c.b16 %v2384, %v2383
        %v2434 = vpack.c.b16 %v2386, %v2385
        %v2435 = vpack.c.b16 %v2388, %v2387
        %v2436 = vpack.c.b16 %v2390, %v2389
        %v2437 = vpack.c.b16 %v2392, %v2391
        %v2438 = vpack.c.b16 %v2394, %v2393
        %v2439 = vpack.c.b16 %v2396, %v2395
        %v2440 = vpack.c.b16 %v2398, %v2397
        %v2441 = vpack.c.b16 %v2400, %v2399
        %v2442 = vpack.c.b16 %v2402, %v2401
        %v2443 = vpack.c.b16 %v2404, %v2403
        %v2444 = vpack.c.b16 %v2406, %v2405
        %v2445 = vpack.c.b16 %v2408, %v2407
        %v2446 = vpack.c.b16 %v2410, %v2409
        %v2447 = vpack.c.b16 %v2412, %v2411
        %v2448 = vpack.c.b16 %v2414, %v2413
        %v2449 = vpack.c.b16 %v2416, %v2415
        %v2450 = vpack.c.b16 %v2418, %v2417
        %2483 = vmatpush.bf16.msra.mxu0 %v2426
        %2484 = vmatpush.bf16.msra.mxu0 %v2425
        %2485 = vmatpush.bf16.msra.mxu0 %v2424
        %2486 = vmatpush.bf16.msra.mxu0 %v2423
        %2487 = vmatpush.bf16.msra.mxu0 %v2422
        %2488 = vmatpush.bf16.msra.mxu0 %v2421
        %2489 = vmatpush.bf16.msra.mxu0 %v2420
        %2490 = vmatpush.bf16.msra.mxu0 %v2419
        %2491 = vmatmul.bf16.gmra.mxu0 %v2195
        %v2492 = vpop.f32.mrf.mxu0
        %v2493 = vadd.f32 0.0, %v2492
        %v2494 = vpop.f32.mrf.mxu0
        %v2495 = vadd.f32 0.0, %v2494
        %2496 = vmatmul.bf16.gmra.mxu0 %v2199
        %v2497 = vpop.f32.mrf.mxu0
        %v2498 = vadd.f32 0.0, %v2497
        %v2499 = vpop.f32.mrf.mxu0
        %v2500 = vadd.f32 0.0, %v2499
        %2501 = vmatmul.bf16.gmra.mxu0 %v2203
        %v2502 = vpop.f32.mrf.mxu0
        %v2503 = vadd.f32 0.0, %v2502
        %v2504 = vpop.f32.mrf.mxu0
        %v2505 = vadd.f32 0.0, %v2504
        %2506 = vmatmul.bf16.gmra.mxu0 %v2207
        %v2507 = vpop.f32.mrf.mxu0
        %v2508 = vadd.f32 0.0, %v2507
        %v2509 = vpop.f32.mrf.mxu0
        %v2510 = vadd.f32 0.0, %v2509
        %2511 = vmatmul.bf16.gmra.mxu0 %v2211
        %v2512 = vpop.f32.mrf.mxu0
        %v2513 = vadd.f32 0.0, %v2512
        %v2514 = vpop.f32.mrf.mxu0
        %v2515 = vadd.f32 0.0, %v2514
        %2516 = vmatmul.bf16.gmra.mxu0 %v2215
        %v2517 = vpop.f32.mrf.mxu0
        %v2518 = vadd.f32 0.0, %v2517
        %v2519 = vpop.f32.mrf.mxu0
        %v2520 = vadd.f32 0.0, %v2519
        %2521 = vmatmul.bf16.gmra.mxu0 %v2219
        %v2522 = vpop.f32.mrf.mxu0
        %v2523 = vadd.f32 0.0, %v2522
        %v2524 = vpop.f32.mrf.mxu0
        %v2525 = vadd.f32 0.0, %v2524
        %2526 = vmatmul.bf16.gmra.mxu0 %v2223
        %v2527 = vpop.f32.mrf.mxu0
        %v2528 = vadd.f32 0.0, %v2527
        %v2529 = vpop.f32.mrf.mxu0
        %v2530 = vadd.f32 0.0, %v2529
        %2531 = vdwg.mxu0
        %2532 = vmatpush.bf16.msra.mxu0 %v2434
        %2533 = vmatpush.bf16.msra.mxu0 %v2433
        %2534 = vmatpush.bf16.msra.mxu0 %v2432
        %2535 = vmatpush.bf16.msra.mxu0 %v2431
        %2536 = vmatpush.bf16.msra.mxu0 %v2430
        %2537 = vmatpush.bf16.msra.mxu0 %v2429
        %2538 = vmatpush.bf16.msra.mxu0 %v2428
        %2539 = vmatpush.bf16.msra.mxu0 %v2427
        %2540 = vmatmul.bf16.gmra.mxu0 %v2196
        %v2541 = vpop.f32.mrf.mxu0
        %v2542 = vadd.f32 %v2493, %v2541
        %v2543 = vpop.f32.mrf.mxu0
        %v2544 = vadd.f32 %v2495, %v2543
        %2545 = vmatmul.bf16.gmra.mxu0 %v2200
        %v2546 = vpop.f32.mrf.mxu0
        %v2547 = vadd.f32 %v2498, %v2546
        %v2548 = vpop.f32.mrf.mxu0
        %v2549 = vadd.f32 %v2500, %v2548
        %2550 = vmatmul.bf16.gmra.mxu0 %v2204
        %v2551 = vpop.f32.mrf.mxu0
        %v2552 = vadd.f32 %v2503, %v2551
        %v2553 = vpop.f32.mrf.mxu0
        %v2554 = vadd.f32 %v2505, %v2553
        %2555 = vmatmul.bf16.gmra.mxu0 %v2208
        %v2556 = vpop.f32.mrf.mxu0
        %v2557 = vadd.f32 %v2508, %v2556
        %v2558 = vpop.f32.mrf.mxu0
        %v2559 = vadd.f32 %v2510, %v2558
        %2560 = vmatmul.bf16.gmra.mxu0 %v2212
        %v2561 = vpop.f32.mrf.mxu0
        %v2562 = vadd.f32 %v2513, %v2561
        %v2563 = vpop.f32.mrf.mxu0
        %v2564 = vadd.f32 %v2515, %v2563
        %2565 = vmatmul.bf16.gmra.mxu0 %v2216
        %v2566 = vpop.f32.mrf.mxu0
        %v2567 = vadd.f32 %v2518, %v2566
        %v2568 = vpop.f32.mrf.mxu0
        %v2569 = vadd.f32 %v2520, %v2568
        %2570 = vmatmul.bf16.gmra.mxu0 %v2220
        %v2571 = vpop.f32.mrf.mxu0
        %v2572 = vadd.f32 %v2523, %v2571
        %v2573 = vpop.f32.mrf.mxu0
        %v2574 = vadd.f32 %v2525, %v2573
        %2575 = vmatmul.bf16.gmra.mxu0 %v2224
        %v2576 = vpop.f32.mrf.mxu0
        %v2577 = vadd.f32 %v2528, %v2576
        %v2578 = vpop.f32.mrf.mxu0
        %v2579 = vadd.f32 %v2530, %v2578
        %2580 = vdwg.mxu0
        %2581 = vmatpush.bf16.msra.mxu0 %v2442
        %2582 = vmatpush.bf16.msra.mxu0 %v2441
        %2583 = vmatpush.bf16.msra.mxu0 %v2440
        %2584 = vmatpush.bf16.msra.mxu0 %v2439
        %2585 = vmatpush.bf16.msra.mxu0 %v2438
        %2586 = vmatpush.bf16.msra.mxu0 %v2437
        %2587 = vmatpush.bf16.msra.mxu0 %v2436
        %2588 = vmatpush.bf16.msra.mxu0 %v2435
        %2589 = vmatmul.bf16.gmra.mxu0 %v2197
        %v2590 = vpop.f32.mrf.mxu0
        %v2591 = vadd.f32 %v2542, %v2590
        %v2592 = vpop.f32.mrf.mxu0
        %v2593 = vadd.f32 %v2544, %v2592
        %2594 = vmatmul.bf16.gmra.mxu0 %v2201
        %v2595 = vpop.f32.mrf.mxu0
        %v2596 = vadd.f32 %v2547, %v2595
        %v2597 = vpop.f32.mrf.mxu0
        %v2598 = vadd.f32 %v2549, %v2597
        %2599 = vmatmul.bf16.gmra.mxu0 %v2205
        %v2600 = vpop.f32.mrf.mxu0
        %v2601 = vadd.f32 %v2552, %v2600
        %v2602 = vpop.f32.mrf.mxu0
        %v2603 = vadd.f32 %v2554, %v2602
        %2604 = vmatmul.bf16.gmra.mxu0 %v2209
        %v2605 = vpop.f32.mrf.mxu0
        %v2606 = vadd.f32 %v2557, %v2605
        %v2607 = vpop.f32.mrf.mxu0
        %v2608 = vadd.f32 %v2559, %v2607
        %2609 = vmatmul.bf16.gmra.mxu0 %v2213
        %v2610 = vpop.f32.mrf.mxu0
        %v2611 = vadd.f32 %v2562, %v2610
        %v2612 = vpop.f32.mrf.mxu0
        %v2613 = vadd.f32 %v2564, %v2612
        %2614 = vmatmul.bf16.gmra.mxu0 %v2217
        %v2615 = vpop.f32.mrf.mxu0
        %v2616 = vadd.f32 %v2567, %v2615
        %v2617 = vpop.f32.mrf.mxu0
        %v2618 = vadd.f32 %v2569, %v2617
        %2619 = vmatmul.bf16.gmra.mxu0 %v2221
        %v2620 = vpop.f32.mrf.mxu0
        %v2621 = vadd.f32 %v2572, %v2620
        %v2622 = vpop.f32.mrf.mxu0
        %v2623 = vadd.f32 %v2574, %v2622
        %2624 = vmatmul.bf16.gmra.mxu0 %v2225
        %v2625 = vpop.f32.mrf.mxu0
        %v2626 = vadd.f32 %v2577, %v2625
        %v2627 = vpop.f32.mrf.mxu0
        %v2628 = vadd.f32 %v2579, %v2627
        %2629 = vdwg.mxu0
        %2630 = vmatpush.bf16.msra.mxu0 %v2450
        %2631 = vmatpush.bf16.msra.mxu0 %v2449
        %2632 = vmatpush.bf16.msra.mxu0 %v2448
        %2633 = vmatpush.bf16.msra.mxu0 %v2447
        %2634 = vmatpush.bf16.msra.mxu0 %v2446
        %2635 = vmatpush.bf16.msra.mxu0 %v2445
        %2636 = vmatpush.bf16.msra.mxu0 %v2444
        %2637 = vmatpush.bf16.msra.mxu0 %v2443
        %2638 = vmatmul.bf16.gmra.mxu0 %v2198
        %v2639 = vpop.f32.mrf.mxu0
        %v2640 = vadd.f32 %v2591, %v2639
        %v2641 = vpop.f32.mrf.mxu0
        %v2642 = vadd.f32 %v2593, %v2641
        %2643 = vmatmul.bf16.gmra.mxu0 %v2202
        %v2644 = vpop.f32.mrf.mxu0
        %v2645 = vadd.f32 %v2596, %v2644
        %v2646 = vpop.f32.mrf.mxu0
        %v2647 = vadd.f32 %v2598, %v2646
        %2648 = vmatmul.bf16.gmra.mxu0 %v2206
        %v2649 = vpop.f32.mrf.mxu0
        %v2650 = vadd.f32 %v2601, %v2649
        %v2651 = vpop.f32.mrf.mxu0
        %v2652 = vadd.f32 %v2603, %v2651
        %2653 = vmatmul.bf16.gmra.mxu0 %v2210
        %v2654 = vpop.f32.mrf.mxu0
        %v2655 = vadd.f32 %v2606, %v2654
        %v2656 = vpop.f32.mrf.mxu0
        %v2657 = vadd.f32 %v2608, %v2656
        %2658 = vmatmul.bf16.gmra.mxu0 %v2214
        %v2659 = vpop.f32.mrf.mxu0
        %v2660 = vadd.f32 %v2611, %v2659
        %v2661 = vpop.f32.mrf.mxu0
        %v2662 = vadd.f32 %v2613, %v2661
        %2663 = vmatmul.bf16.gmra.mxu0 %v2218
        %v2664 = vpop.f32.mrf.mxu0
        %v2665 = vadd.f32 %v2616, %v2664
        %v2666 = vpop.f32.mrf.mxu0
        %v2667 = vadd.f32 %v2618, %v2666
        %2668 = vmatmul.bf16.gmra.mxu0 %v2222
        %v2669 = vpop.f32.mrf.mxu0
        %v2670 = vadd.f32 %v2621, %v2669
        %v2671 = vpop.f32.mrf.mxu0
        %v2672 = vadd.f32 %v2623, %v2671
        %2673 = vmatmul.bf16.gmra.mxu0 %v2226
        %v2674 = vpop.f32.mrf.mxu0
        %v2675 = vadd.f32 %v2626, %v2674
        %v2676 = vpop.f32.mrf.mxu0
        %v2677 = vadd.f32 %v2628, %v2676
        %2678 = vdwg.mxu0
        %v2679 = vpack.c.bf16 %v2640, %v2640
        %v2680 = vpack.c.bf16 %v2642, %v2642
        %v2681 = vpack.c.bf16 %v2645, %v2645
        %v2682 = vpack.c.bf16 %v2647, %v2647
        %v2683 = vpack.c.bf16 %v2650, %v2650
        %v2684 = vpack.c.bf16 %v2652, %v2652
        %v2685 = vpack.c.bf16 %v2655, %v2655
        %v2686 = vpack.c.bf16 %v2657, %v2657
        %v2687 = vpack.c.bf16 %v2660, %v2660
        %v2688 = vpack.c.bf16 %v2662, %v2662
        %v2689 = vpack.c.bf16 %v2665, %v2665
        %v2690 = vpack.c.bf16 %v2667, %v2667
        %v2691 = vpack.c.bf16 %v2670, %v2670
        %v2692 = vpack.c.bf16 %v2672, %v2672
        %v2693 = vpack.c.bf16 %v2675, %v2675
        %v2694 = vpack.c.bf16 %v2677, %v2677
        %v2695 = vld [vmem:[%s4] sm:$0x1]
        %v2697 = vpack.i.b16 %v2695, %v2695
        %v2699 = vperm.slane %v2697, 0
        %v2700 = vunpack.c.l.bf16 %v2679
        %v2701 = vunpack.c.l.bf16 %v2680
        %v2702 = vunpack.c.l.bf16 %v2681
        %v2703 = vunpack.c.l.bf16 %v2682
        %v2704 = vunpack.c.l.bf16 %v2683
        %v2705 = vunpack.c.l.bf16 %v2684
        %v2706 = vunpack.c.l.bf16 %v2685
        %v2707 = vunpack.c.l.bf16 %v2686
        %v2708 = vunpack.c.l.bf16 %v2687
        %v2709 = vunpack.c.l.bf16 %v2688
        %v2710 = vunpack.c.l.bf16 %v2689
        %v2711 = vunpack.c.l.bf16 %v2690
        %v2712 = vunpack.c.l.bf16 %v2691
        %v2713 = vunpack.c.l.bf16 %v2692
        %v2714 = vunpack.c.l.bf16 %v2693
        %v2715 = vunpack.c.l.bf16 %v2694
        %v2716 = vunpack.c.l.bf16 %v2699
        %v2717 = vadd.f32 %v2700, %v2716
        %v2718 = vadd.f32 %v2701, %v2716
        %v2719 = vadd.f32 %v2702, %v2716
        %v2720 = vadd.f32 %v2703, %v2716
        %v2721 = vadd.f32 %v2704, %v2716
        %v2722 = vadd.f32 %v2705, %v2716
        %v2723 = vadd.f32 %v2706, %v2716
        %v2724 = vadd.f32 %v2707, %v2716
        %v2725 = vadd.f32 %v2708, %v2716
        %v2726 = vadd.f32 %v2709, %v2716
        %v2727 = vadd.f32 %v2710, %v2716
        %v2728 = vadd.f32 %v2711, %v2716
        %v2729 = vadd.f32 %v2712, %v2716
        %v2730 = vadd.f32 %v2713, %v2716
        %v2731 = vadd.f32 %v2714, %v2716
        %v2732 = vadd.f32 %v2715, %v2716
        %v2733 = vpack.c.bf16 %v2718, %v2717
        %v2734 = vpack.c.bf16 %v2720, %v2719
        %v2735 = vpack.c.bf16 %v2722, %v2721
        %v2736 = vpack.c.bf16 %v2724, %v2723
        %v2737 = vpack.c.bf16 %v2726, %v2725
        %v2738 = vpack.c.bf16 %v2728, %v2727
        %v2739 = vpack.c.bf16 %v2730, %v2729
        %v2740 = vpack.c.bf16 %v2732, %v2731
        %v2741 = vunpack.c.l.bf16 %v2733
        %v2742 = vunpack.c.h.bf16 %v2733
        %v2743 = vunpack.c.l.bf16 %v2734
        %v2744 = vunpack.c.h.bf16 %v2734
        %v2745 = vunpack.c.l.bf16 %v2735
        %v2746 = vunpack.c.h.bf16 %v2735
        %v2747 = vunpack.c.l.bf16 %v2736
        %v2748 = vunpack.c.h.bf16 %v2736
        %v2749 = vunpack.c.l.bf16 %v2737
        %v2750 = vunpack.c.h.bf16 %v2737
        %v2751 = vunpack.c.l.bf16 %v2738
        %v2752 = vunpack.c.h.bf16 %v2738
        %v2753 = vunpack.c.l.bf16 %v2739
        %v2754 = vunpack.c.h.bf16 %v2739
        %v2755 = vunpack.c.l.bf16 %v2740
        %v2756 = vunpack.c.h.bf16 %v2740
        %v2757 = vtanh.pop %v2741
        %v2758 = vtanh.pop %v2742
        %v2759 = vtanh.pop %v2743
        %v2760 = vtanh.pop %v2744
        %v2761 = vtanh.pop %v2745
        %v2762 = vtanh.pop %v2746
        %v2763 = vtanh.pop %v2747
        %v2764 = vtanh.pop %v2748
        %v2765 = vtanh.pop %v2749
        %v2766 = vtanh.pop %v2750
        %v2767 = vtanh.pop %v2751
        %v2768 = vtanh.pop %v2752
        %v2769 = vtanh.pop %v2753
        %v2770 = vtanh.pop %v2754
        %v2771 = vtanh.pop %v2755
        %v2772 = vtanh.pop %v2756
        %v2773 = vpack.c.bf16 %v2758, %v2757
        %v2774 = vpack.c.bf16 %v2760, %v2759
        %v2775 = vpack.c.bf16 %v2762, %v2761
        %v2776 = vpack.c.bf16 %v2764, %v2763
        %v2777 = vpack.c.bf16 %v2766, %v2765
        %v2778 = vpack.c.bf16 %v2768, %v2767
        %v2779 = vpack.c.bf16 %v2770, %v2769
        %v2780 = vpack.c.bf16 %v2772, %v2771
        %v2781 = vld [vmem:[%s5] sm:$0x1]
        %2782 = vmatpush.bf16.xpose.msra.mxu0 %v2780
        %2783 = vmatpush.bf16.xpose.msra.mxu0 %v2779
        %2784 = vmatpush.bf16.xpose.msra.mxu0 %v2778
        %2785 = vmatpush.bf16.xpose.msra.mxu0 %v2777
        %2786 = vmatpush.bf16.xpose.msra.mxu0 %v2776
        %2787 = vmatpush.bf16.xpose.msra.mxu0 %v2775
        %2788 = vmatpush.bf16.xpose.msra.mxu0 %v2774
        %2789 = vmatpush.bf16.xpose.msra.mxu0 %v2773
        %2790 = vmatmul.bf16.gmra.mxu0 %v2781
        %v2791 = vpop.f32.mrf.mxu0
        %v2792 = vadd.f32 0.0, %v2791
        %v2793 = vpop.f32.mrf.mxu0
        %2794 = vdwg.mxu0
        %s2795 = smul.u32 %s25, 128
        %s2796 = ssub.s32 320, %s2795
        %v2797 = vlaneseq
        %v2798 = vand.u32 %v2797, 127
        %v2799 = vstv %s2796
        %vm2800 = vcmp.lt.s32.totalorder %v2798, %v2799
        %v2801 = vsel %vm2800, %v2792, -1e+30
        %p2802 = scmp.eq.s32.totalorder %s25, 0
        // Predicated region
        $region45: #{tpu_custom_call.1} parent=43 // pred_check
          %p2803 = pneg %p2802
        $region46: #{tpu_custom_call.1} parent=43 // pred_check_branch
          %2805 = sbr.rel (%p2803) target = $region48
        $region47: #{tpu_custom_call.1} parent=43 // pred_region
          %vm2806 = vcmask 0
          %2807 = vst.msk [vmem:[#allocation2] sm:$0x1] %vm2806, -inf
          %2808 = vst.msk [vmem:[#allocation3] sm:$0x1] %vm2806, 0.0
          %v2809 = vlaneseq
          %vm2810 = vcmp.ge.s32.totalorder %v2809, 0
          %vm2811 = vcmp.lt.s32.totalorder %v2809, 512
          %vm2812 = vmand %vm2810, %vm2811
          %2813 = vst.msk [vmem:[#allocation4] sm:$0xf] %vm2812, 0.0
        $region48: #{tpu_custom_call.1} parent=43 // pred_fallthru
          _
        %v2814 = vld [vmem:[#allocation2] sm:$0x1]
        %vm2815 = vcmask 1040384
        %v2816 = vsel %vm2815, %v2801, -inf
        %2817 = vmax.xlane.f32.xlu0 %v2816
        %v2818 = vpop.xlane.xlu0 %2817
        %v2819 = vmax.f32 %v2814, %v2818
        %v2820 = vsub.f32 %v2814, %v2819
        %v2821 = vmul.f32 %v2820, 1.442695
        %v2822 = vpow.pop %v2821
        %2824 = vset.pattern.permute.xlu0 0
        %2825 = vperm.xlu0 %2824, %v2819
        %v2826 = vpop.permute.xlu0 %2825
        %v2828 = vperm.slane %v2826, 0
        %v2829 = vsub.f32 %v2801, %v2828
        %v2830 = vmul.f32 %v2829, 1.442695
        %v2831 = vpow.pop %v2830
        %v2832 = vld [vmem:[#allocation3] sm:$0x1]
        %v2833 = vmul.f32 %v2822, %v2832
        %v2834 = vsel %vm2815, %v2831, 0.0
        %2835 = vadd.xlane.f32.xlu0 %v2834
        %v2836 = vpop.xlane.xlu0 %2835
        %v2837 = vadd.f32 %v2833, %v2836
        %vm2838 = vcmask 0
        %2839 = vst.msk [vmem:[#allocation3] sm:$0x1] %vm2838, %v2837
        %v2840 = vpack.c.bf16 %v2831, %v2831
        %2841 = vmatpush.bf16.msra.mxu0 %v2223
        %2842 = vmatpush.bf16.msra.mxu0 %v2219
        %2843 = vmatpush.bf16.msra.mxu0 %v2215
        %2844 = vmatpush.bf16.msra.mxu0 %v2211
        %2845 = vmatpush.bf16.msra.mxu0 %v2207
        %2846 = vmatpush.bf16.msra.mxu0 %v2203
        %2847 = vmatpush.bf16.msra.mxu0 %v2199
        %2848 = vmatpush.bf16.msra.mxu0 %v2195
        %2849 = vmatmul.bf16.gmra.mxu0 %v2840
        %v2850 = vpop.f32.mrf.mxu0
        %v2851 = vadd.f32 0.0, %v2850
        %v2852 = vpop.f32.mrf.mxu0
        %2853 = vdwg.mxu0
        %2854 = vmatpush.bf16.msra.mxu0 %v2224
        %2855 = vmatpush.bf16.msra.mxu0 %v2220
        %2856 = vmatpush.bf16.msra.mxu0 %v2216
        %2857 = vmatpush.bf16.msra.mxu0 %v2212
        %2858 = vmatpush.bf16.msra.mxu0 %v2208
        %2859 = vmatpush.bf16.msra.mxu0 %v2204
        %2860 = vmatpush.bf16.msra.mxu0 %v2200
        %2861 = vmatpush.bf16.msra.mxu0 %v2196
        %2862 = vmatmul.bf16.gmra.mxu0 %v2840
        %v2863 = vpop.f32.mrf.mxu0
        %v2864 = vadd.f32 0.0, %v2863
        %v2865 = vpop.f32.mrf.mxu0
        %2866 = vdwg.mxu0
        %2867 = vmatpush.bf16.msra.mxu0 %v2225
        %2868 = vmatpush.bf16.msra.mxu0 %v2221
        %2869 = vmatpush.bf16.msra.mxu0 %v2217
        %2870 = vmatpush.bf16.msra.mxu0 %v2213
        %2871 = vmatpush.bf16.msra.mxu0 %v2209
        %2872 = vmatpush.bf16.msra.mxu0 %v2205
        %2873 = vmatpush.bf16.msra.mxu0 %v2201
        %2874 = vmatpush.bf16.msra.mxu0 %v2197
        %2875 = vmatmul.bf16.gmra.mxu0 %v2840
        %v2876 = vpop.f32.mrf.mxu0
        %v2877 = vadd.f32 0.0, %v2876
        %v2878 = vpop.f32.mrf.mxu0
        %2879 = vdwg.mxu0
        %2880 = vmatpush.bf16.msra.mxu0 %v2226
        %2881 = vmatpush.bf16.msra.mxu0 %v2222
        %2882 = vmatpush.bf16.msra.mxu0 %v2218
        %2883 = vmatpush.bf16.msra.mxu0 %v2214
        %2884 = vmatpush.bf16.msra.mxu0 %v2210
        %2885 = vmatpush.bf16.msra.mxu0 %v2206
        %2886 = vmatpush.bf16.msra.mxu0 %v2202
        %2887 = vmatpush.bf16.msra.mxu0 %v2198
        %2888 = vmatmul.bf16.gmra.mxu0 %v2840
        %v2889 = vpop.f32.mrf.mxu0
        %v2890 = vadd.f32 0.0, %v2889
        %v2891 = vpop.f32.mrf.mxu0
        %2892 = vdwg.mxu0
        %v2893 = vld [vmem:[#allocation4] sm:$0xf]
        %2895 = vset.pattern.permute.xlu0 0
        %2896 = vperm.xlu0 %2895, %v2822
        %v2897 = vpop.permute.xlu0 %2896
        %v2899 = vperm.slane %v2897, 0
        %v2900 = vmul.f32 %v2899, %v2893
        %v2905 = vrot.slane %v2864, 7
        %v2906 = vrot.slane %v2877, 6
        %v2907 = vrot.slane %v2890, 5
        %v2908 = vsel %vm2815, %v2851, %v2905
        %vm2909 = vcmask 1042434
        %v2910 = vsel %vm2909, %v2906, %v2907
        %vm2911 = vcmask 1041408
        %v2912 = vsel %vm2911, %v2908, %v2910
        %v2914 = vadd.f32 %v2900, %v2912
        %v2915 = vlaneseq
        %vm2916 = vcmp.ge.s32.totalorder %v2915, 0
        %vm2917 = vcmp.lt.s32.totalorder %v2915, 512
        %vm2918 = vmand %vm2916, %vm2917
        %2919 = vst.msk [vmem:[#allocation4] sm:$0xf] %vm2918, %v2914
        %2920 = vst.msk [vmem:[#allocation2] sm:$0x1] %vm2838, %v2819
        %p2921 = scmp.eq.s32.totalorder %s25, 2
        // Predicated region
        $region49: #{tpu_custom_call.1} parent=43 // pred_check
          %p2922 = pneg %p2921
        $region50: #{tpu_custom_call.1} parent=43 // pred_check_branch
          %2924 = sbr.rel (%p2922) target = $region52
        $region51: #{tpu_custom_call.1} parent=43 // pred_region
          %v2925 = vld [vmem:[#allocation4] sm:$0xf]
          %v2926 = vld [vmem:[#allocation3] sm:$0x1]
          %2928 = vset.pattern.permute.xlu0 0
          %2929 = vperm.xlu0 %2928, %v2926
          %v2930 = vpop.permute.xlu0 %2929
          %v2932 = vperm.slane %v2930, 0
          %v2933 = vrcp.pop %v2932
          %v2934 = vmul.f32 %v2932, %v2933
          %v2935 = vsub.f32 1.0, %v2934
          %v2936 = vmul.f32 %v2933, %v2935
          %v2937 = vadd.f32 %v2933, %v2936
          %vm2938 = vweird.f32 %v2932
          %vm2939 = vweird.f32 %v2933
          %vm2940 = vmor %vm2938, %vm2939
          %v2941 = vsel %vm2940, %v2933, %v2937
          %v2942 = vand.u32 2147483647, %v2932
          %vm2943 = vcmp.eq.f32.partialorder %v2942, 8.507059e+37
          %v2944 = vand.u32 %v2932, 2147483648
          %v2945 = vor.u32 1.1754944e-38, %v2944
          %v2946 = vsel %vm2943, %v2945, %v2941
          %v2947 = vmul.f32 %v2925, %v2946
          %2948 = vst.msk [vmem:[%s267] sm:$0xf] %vm2918, %v2947
        $region52: #{tpu_custom_call.1} parent=43 // pred_fallthru
          _
        %s2949 = sand.u32 %s173, 1
        %s2950 = scalar_lea.sflag [#allocation6], %s2949
        %s2951 = sand.u32 %s173, 1
        %s2952 = smul.addr %s2951, 4
        %s2953 = scalar_lea.vmem [#allocation5], %s2952
        // Predicated region
        $region53: #{tpu_custom_call.1} parent=43 // pred_check
          %p2954 = pneg %p183
        $region54: #{tpu_custom_call.1} parent=43 // pred_check_branch
          %2956 = sbr.rel (%p2954) target = $region56
        $region55: #{tpu_custom_call.1} parent=43 // pred_region
          %2958 = vsyncadd %s2950, 0
          %s2959 = smul.addr %s24, 4
          %s2960 = scalar_lea.hbm %s6, %s2959
          %s2962 = sshll.u32 %s2953, 4
          %s2963 = int_to_ptr.vmem [resolvable:$true] %s2962
          %s2964 = sshll.u32 %s2960, 4
          %s2965 = int_to_ptr.hbm [resolvable:$true] %s2964
          %2967 = dma.vmem_to_hbm [thread:$0]  %s2963, 64, %s2965, %s2950
        $region56: #{tpu_custom_call.1} parent=43 // pred_fallthru
          _
      $region44: #{tpu_custom_call.1} parent=5 // pred_fallthru
        _
      %p2968 = scmp.le.s32.totalorder 2, %s15
      // Predicated region
      $region57: #{tpu_custom_call.1} parent=5 // pred_check
        %p2969 = pneg %p2968
      $region58: #{tpu_custom_call.1} parent=5 // pred_check_branch
        %2971 = sbr.rel (%p2969) target = $region60
      $region59: #{tpu_custom_call.1} parent=5 // pred_region
        %s2972 = ssub.s32 %s15, 2
        // Predicated region
        $region61: #{tpu_custom_call.1} parent=59 // pred_check
          %p2973 = pneg %p189
        $region62: #{tpu_custom_call.1} parent=59 // pred_check_branch
          %2975 = sbr.rel (%p2973) target = $region64
        $region63: #{tpu_custom_call.1} parent=59 // pred_region
          %s2976 = sand.u32 %s174, 1
          %s2977 = scalar_lea.sflag [#allocation6], %s2976
          %s2978 = sand.u32 %s174, 1
          %s2979 = smul.addr %s2978, 4
          %s2980 = scalar_lea.vmem [#allocation5], %s2979
          %2982 = dma.done %s2977, 64
        $region64: #{tpu_custom_call.1} parent=59 // pred_fallthru
          _
      $region60: #{tpu_custom_call.1} parent=5 // pred_fallthru
        _
    $region6: #{tpu_custom_call.1} parent=1 // loop_footer
      %s19 = sadd.s32 1, %s15
    $region7: #{tpu_custom_call.1} parent=1 // loop_footer_branch
      %14 = sbr.rel target = $region3
    $region8: #{tpu_custom_call.1} parent=1 // loop_exit
      _
    %2983 = vsyncpa [#allocation6], 1
    %s2984 = scalar_lea.sflag [#allocation6], 1
    %2985 = vsyncpa %s2984, 1

</llo_original>
